<compile_context>
chip_gen: v7x
topology: tpu7x:2x2x1
jax: 0.10.0
libtpu: 0.0.40
codegen_flags: <defaults>
</compile_context>

<pallas_src>
import functools
import math

import jax
import jax.numpy as jnp
from jax import lax
from jax.experimental import pallas as pl
from jax.experimental.pallas import tpu as pltpu

LN_EPS = 1e-5                     # PyTorch nn.LayerNorm default
VMEM_LIMIT = 64 * 1024 * 1024     # explicit scoped-VMEM budget (re-derive for v7x)


def _layernorm(x, w, b):
    mean = jnp.mean(x, axis=-1, keepdims=True)
    var = jnp.mean((x - mean) ** 2, axis=-1, keepdims=True)
    return (x - mean) * lax.rsqrt(var + LN_EPS) * w + b


def _gelu_tanh(x):
    # GELU(approximate='tanh'):  0.5*x*(1+tanh(sqrt(2/pi)*(x+0.044715*x^3)))
    c = 0.7978845608028654
    return 0.5 * x * (1.0 + jnp.tanh(c * (x + 0.044715 * x * x * x)))


# --------------------------------------------------------------------------
# Pallas kernels
# --------------------------------------------------------------------------
def decoder_block_kernel(x_ref, ln1w_ref, ln1b_ref, wqkv_ref, bqkv_ref,
                         wproj_ref, bproj_ref, ln2w_ref, ln2b_ref,
                         w1_ref, b1_ref, w2_ref, b2_ref, out_ref,
                         *, num_heads):
    x = x_ref[0].astype(jnp.float32)              # (T, C) residual stream in f32
    T, C = x.shape
    H = num_heads
    hd = C // H
    scale = 1.0 / math.sqrt(hd)                   # SDPA default scale

    # ---- attention sub-block:  x + proj(attn(ln1(x))) ----
    xn = _layernorm(x, ln1w_ref[0], ln1b_ref[0])
    qkv = jnp.dot(xn.astype(jnp.bfloat16), wqkv_ref[...],     # (C,3C) pre-transposed
                  preferred_element_type=jnp.float32) + bqkv_ref[0]
    q, k, v = qkv[:, :C], qkv[:, C:2 * C], qkv[:, 2 * C:]

    # head-major (H, T, hd) bf16 operands; single batched contraction per stage
    q3 = jnp.stack([q[:, h * hd:(h + 1) * hd] for h in range(H)], 0).astype(jnp.bfloat16)
    k3 = jnp.stack([k[:, h * hd:(h + 1) * hd] for h in range(H)], 0).astype(jnp.bfloat16)
    v3 = jnp.stack([v[:, h * hd:(h + 1) * hd] for h in range(H)], 0).astype(jnp.bfloat16)

    s = jnp.einsum('hqd,hkd->hqk', q3, k3,
                   preferred_element_type=jnp.float32) * scale
    row = lax.broadcasted_iota(jnp.int32, (H, T, T), 1)
    col = lax.broadcasted_iota(jnp.int32, (H, T, T), 2)
    s = jnp.where(row >= col, s, -jnp.inf)
    m = jnp.max(s, axis=-1, keepdims=True)
    e = jnp.exp(s - m)
    inv = pl.reciprocal(jnp.sum(e, axis=-1, keepdims=True), approx=True)
    p = (e * inv).astype(jnp.bfloat16)            # bf16 probs for the PV matmul
    y3 = jnp.einsum('hqk,hkd->hqd', p, v3, preferred_element_type=jnp.float32)

    y = jnp.concatenate([y3[h] for h in range(H)], axis=-1)   # (T, C) head-major
    y = jnp.dot(y.astype(jnp.bfloat16), wproj_ref[...],
                preferred_element_type=jnp.float32) + bproj_ref[0]
    x1 = x + y

    # ---- MLP sub-block:  x1 + W2 gelu(W1 ln2(x1) + b1) + b2 ----
    xn2 = _layernorm(x1, ln2w_ref[0], ln2b_ref[0])
    h1 = jnp.dot(xn2.astype(jnp.bfloat16), w1_ref[...],
                 preferred_element_type=jnp.float32) + b1_ref[0]
    h1 = _gelu_tanh(h1)
    h2 = jnp.dot(h1.astype(jnp.bfloat16), w2_ref[...],
                 preferred_element_type=jnp.float32) + b2_ref[0]
    # TODO(synk): nn.Dropout() is identity in eval mode; training-mode RNG drop not modeled.
    out_ref[0] = (x1 + h2).astype(out_ref.dtype)


def final_kernel(x_ref, lnfw_ref, lnfb_ref, wlm_ref, out_ref):
    x = x_ref[0].astype(jnp.float32)              # (T, C)
    xn = _layernorm(x, lnfw_ref[0], lnfb_ref[0])
    out_ref[0] = jnp.dot(xn.astype(jnp.bfloat16), wlm_ref[...],   # (C, tv) vocab tile
                         preferred_element_type=jnp.float32)


# --------------------------------------------------------------------------
# Wrappers
# --------------------------------------------------------------------------
def decoder_block(x, p, num_heads):
    B, T, C = x.shape
    weights = [p["ln1_w"], p["ln1_b"], p["wqkv"], p["bqkv"],
               p["wproj"], p["bproj"], p["ln2_w"], p["ln2_b"],
               p["w1"], p["b1"], p["w2"], p["b2"]]
    in_specs = ([pl.BlockSpec((1, T, C), lambda b: (b, 0, 0))]
                + [pl.BlockSpec(w.shape, lambda b: (0, 0)) for w in weights])
    kernel = functools.partial(decoder_block_kernel, num_heads=num_heads)
    return pl.pallas_call(
        kernel,
        out_shape=jax.ShapeDtypeStruct((B, T, C), x.dtype),
        grid_spec=pltpu.PrefetchScalarGridSpec(
            num_scalar_prefetch=0,
            grid=(B,),
            in_specs=in_specs,
            out_specs=pl.BlockSpec((1, T, C), lambda b: (b, 0, 0))),
        compiler_params=pltpu.CompilerParams(
            dimension_semantics=("parallel",),
            vmem_limit_bytes=VMEM_LIMIT),
    )(x, *weights)


def _vocab_tile(V, max_tile=4096):
    """Largest tile <= max_tile that evenly divides V (real configs: pad V to x128)."""
    if V <= max_tile:
        return V
    for t in range(max_tile, 0, -1):
        if V % t == 0:
            return t
    return V


def final_ln_lm_head(x, lnf_w, lnf_b, wlm_t):
    B, T, C = x.shape
    V = wlm_t.shape[1]                            # wlm_t is (C, V) pre-transposed
    tv = _vocab_tile(V)
    in_specs = [pl.BlockSpec((1, T, C), lambda b, v: (b, 0, 0)),
                pl.BlockSpec(lnf_w.shape, lambda b, v: (0, 0)),
                pl.BlockSpec(lnf_b.shape, lambda b, v: (0, 0)),
                pl.BlockSpec((C, tv), lambda b, v: (0, v))]
    return pl.pallas_call(
        final_kernel,
        out_shape=jax.ShapeDtypeStruct((B, T, V), jnp.float32),
        grid_spec=pltpu.PrefetchScalarGridSpec(
            num_scalar_prefetch=0,
            grid=(B, V // tv),
            in_specs=in_specs,
            out_specs=pl.BlockSpec((1, T, tv), lambda b, v: (b, 0, v))),
        compiler_params=pltpu.CompilerParams(
            dimension_semantics=("parallel", "parallel"),
            vmem_limit_bytes=VMEM_LIMIT),
    )(x, lnf_w, lnf_b, wlm_t)


def simple_gpt_forward(tokens, params, num_heads):
    B, T = tokens.shape
    # Embedding lookup: plain-JAX glue; activations travel in bf16 between kernels.
    x = (jnp.take(params["tok_emb"], tokens, axis=0).astype(jnp.float32)
         + params["pos_emb"][:T].astype(jnp.float32)).astype(jnp.bfloat16)
    for bp in params["blocks"]:
        x = decoder_block(x, bp, num_heads)
    return final_ln_lm_head(x, params["ln_f_w"], params["ln_f_b"], params["lm_head_w"])


# --------------------------------------------------------------------------
# Deterministic parameter init + pure-JAX f32 reference for verification
#   (matmul weights stored bf16, pre-transposed to (in, out); biases/LN in f32)
# --------------------------------------------------------------------------
def init_params(key, vocab_size, embed_dim, block_size, num_layers):
    def nrm(k, shape, scale=0.02):
        return (scale * jax.random.normal(k, shape)).astype(jnp.float32)

    keys = jax.random.split(key, 2 + num_layers + 1)
    C = embed_dim
    params = {
        "tok_emb": nrm(keys[0], (vocab_size, C)).astype(jnp.bfloat16),
        "pos_emb": nrm(keys[1], (block_size, C)).astype(jnp.bfloat16),
        "ln_f_w": jnp.ones((1, C), jnp.float32),
        "ln_f_b": jnp.zeros((1, C), jnp.float32),
        "lm_head_w": nrm(keys[-1], (C, vocab_size)).astype(jnp.bfloat16),  # (in, out)
        "blocks": [],
    }
    for i in range(num_layers):
        ks = jax.random.split(keys[2 + i], 8)
        params["blocks"].append({
            "ln1_w": jnp.ones((1, C), jnp.float32),
            "ln1_b": jnp.zeros((1, C), jnp.float32),
            "wqkv": nrm(ks[0], (C, 3 * C)).astype(jnp.bfloat16),   # (in, out)
            "bqkv": nrm(ks[1], (1, 3 * C)),
            "wproj": nrm(ks[2], (C, C)).astype(jnp.bfloat16),      # (in, out)
            "bproj": nrm(ks[3], (1, C)),
            "ln2_w": jnp.ones((1, C), jnp.float32),
            "ln2_b": jnp.zeros((1, C), jnp.float32),
            "w1": nrm(ks[4], (C, 4 * C)).astype(jnp.bfloat16),     # (in, out)
            "b1": nrm(ks[5], (1, 4 * C)),
            "w2": nrm(ks[6], (4 * C, C)).astype(jnp.bfloat16),     # (in, out)
            "b2": nrm(ks[7], (1, C)),
        })
    return params


def ref_forward(tokens, params, num_heads):
    """Pure-JAX f32-math reference using the same (bf16-stored) weights."""
    B, T = tokens.shape
    x = (jnp.take(params["tok_emb"], tokens, axis=0).astype(jnp.float32)
         + params["pos_emb"][:T].astype(jnp.float32))
    C = x.shape[-1]
    hd = C // num_heads
    for p in params["blocks"]:
        xn = _layernorm(x, p["ln1_w"][0], p["ln1_b"][0])
        qkv = xn @ p["wqkv"].astype(jnp.float32) + p["bqkv"][0]
        q, k, v = qkv[..., :C], qkv[..., C:2 * C], qkv[..., 2 * C:]
        q = q.reshape(B, T, num_heads, hd).transpose(0, 2, 1, 3)
        k = k.reshape(B, T, num_heads, hd).transpose(0, 2, 1, 3)
        v = v.reshape(B, T, num_heads, hd).transpose(0, 2, 1, 3)
        s = jnp.einsum("bhqd,bhkd->bhqk", q, k) / (hd ** 0.5)
        mask = jnp.tril(jnp.ones((T, T), bool))
        s = jnp.where(mask, s, -jnp.inf)
        a = jax.nn.softmax(s, axis=-1)
        y = jnp.einsum("bhqk,bhkd->bhqd", a, v).transpose(0, 2, 1, 3).reshape(B, T, C)
        x = x + (y @ p["wproj"].astype(jnp.float32) + p["bproj"][0])
        xn2 = _layernorm(x, p["ln2_w"][0], p["ln2_b"][0])
        h = _gelu_tanh(xn2 @ p["w1"].astype(jnp.float32) + p["b1"][0])
        x = x + (h @ p["w2"].astype(jnp.float32) + p["b2"][0])
    xn = _layernorm(x, params["ln_f_w"][0], params["ln_f_b"][0])
    return xn @ params["lm_head_w"].astype(jnp.float32)


if __name__ == "__main__":
    # Small config: vocab=64, embed=32, block_size=16, heads=4, layers=2
    VOCAB, EMBED, BLOCK, HEADS, LAYERS = 64, 32, 16, 4, 2
    B, T = 2, 8

    key = jax.random.PRNGKey(0)
    k_params, k_tok = jax.random.split(key)
    params = init_params(k_params, VOCAB, EMBED, BLOCK, LAYERS)
    tokens = jax.random.randint(k_tok, (B, T), 0, VOCAB, dtype=jnp.int32)

    logits = simple_gpt_forward(tokens, params, HEADS)
    logits = jax.block_until_ready(logits)

    ref = ref_forward(tokens, params, HEADS)
    assert logits.shape == (B, T, VOCAB)
    # bf16 activations/matmul inputs + approx reciprocal => looser tolerance vs f32 reference
    assert jnp.allclose(logits, ref, atol=2e-2, rtol=2e-2), "mismatch vs JAX reference"

    print("KERNEL_OK")
</pallas_src>

<mosaic_0001>
module attributes {stable_mosaic.version = 11 : i64} {
  func.func @decoder_block_kernel(%arg0: i32, %arg1: memref<1x8x32xbf16, #tpu.memory_space<vmem>>, %arg2: memref<1x32xf32, #tpu.memory_space<vmem>>, %arg3: memref<1x32xf32, #tpu.memory_space<vmem>>, %arg4: memref<32x96xbf16, #tpu.memory_space<vmem>>, %arg5: memref<1x96xf32, #tpu.memory_space<vmem>>, %arg6: memref<32x32xbf16, #tpu.memory_space<vmem>>, %arg7: memref<1x32xf32, #tpu.memory_space<vmem>>, %arg8: memref<1x32xf32, #tpu.memory_space<vmem>>, %arg9: memref<1x32xf32, #tpu.memory_space<vmem>>, %arg10: memref<32x128xbf16, #tpu.memory_space<vmem>>, %arg11: memref<1x128xf32, #tpu.memory_space<vmem>>, %arg12: memref<128x32xbf16, #tpu.memory_space<vmem>>, %arg13: memref<1x32xf32, #tpu.memory_space<vmem>>, %arg14: memref<1x8x32xbf16, #tpu.memory_space<vmem>>) attributes {dimension_semantics = [#tpu.dimension_semantics<parallel>], iteration_bounds = array<i64: 2>, scalar_prefetch = 0 : i64, scratch_operands = 0 : i64, tpu.core_type = #tpu.core_type<tc>, window_params = [{transform_indices = @transform_0, window_bounds = array<i64: 1, 8, 32>}, {pipeline_mode = #tpu.pipeline_mode<synchronous>, transform_indices = @transform_1, window_bounds = array<i64: 1, 32>}, {pipeline_mode = #tpu.pipeline_mode<synchronous>, transform_indices = @transform_2, window_bounds = array<i64: 1, 32>}, {pipeline_mode = #tpu.pipeline_mode<synchronous>, transform_indices = @transform_3, window_bounds = array<i64: 32, 96>}, {pipeline_mode = #tpu.pipeline_mode<synchronous>, transform_indices = @transform_4, window_bounds = array<i64: 1, 96>}, {pipeline_mode = #tpu.pipeline_mode<synchronous>, transform_indices = @transform_5, window_bounds = array<i64: 32, 32>}, {pipeline_mode = #tpu.pipeline_mode<synchronous>, transform_indices = @transform_6, window_bounds = array<i64: 1, 32>}, {pipeline_mode = #tpu.pipeline_mode<synchronous>, transform_indices = @transform_7, window_bounds = array<i64: 1, 32>}, {pipeline_mode = #tpu.pipeline_mode<synchronous>, transform_indices = @transform_8, window_bounds = array<i64: 1, 32>}, {pipeline_mode = #tpu.pipeline_mode<synchronous>, transform_indices = @transform_9, window_bounds = array<i64: 32, 128>}, {pipeline_mode = #tpu.pipeline_mode<synchronous>, transform_indices = @transform_10, window_bounds = array<i64: 1, 128>}, {pipeline_mode = #tpu.pipeline_mode<synchronous>, transform_indices = @transform_11, window_bounds = array<i64: 128, 32>}, {pipeline_mode = #tpu.pipeline_mode<synchronous>, transform_indices = @transform_12, window_bounds = array<i64: 1, 32>}, {transform_indices = @transform_13, window_bounds = array<i64: 1, 8, 32>}]} {
    %c0 = arith.constant 0 : index
    %c0_0 = arith.constant 0 : index
    %c0_1 = arith.constant 0 : index
    %0 = vector.load %arg1[%c0, %c0_0, %c0_1] : memref<1x8x32xbf16, #tpu.memory_space<vmem>>, vector<1x8x32xbf16>
    %1 = vector.shape_cast %0 : vector<1x8x32xbf16> to vector<8x32xbf16>
    %2 = arith.extf %1 : vector<8x32xbf16> to vector<8x32xf32>
    %c0_2 = arith.constant 0 : index
    %c0_3 = arith.constant 0 : index
    %3 = vector.load %arg2[%c0_2, %c0_3] : memref<1x32xf32, #tpu.memory_space<vmem>>, vector<1x32xf32>
    %4 = vector.shape_cast %3 : vector<1x32xf32> to vector<32xf32>
    %c0_4 = arith.constant 0 : index
    %c0_5 = arith.constant 0 : index
    %5 = vector.load %arg3[%c0_4, %c0_5] : memref<1x32xf32, #tpu.memory_space<vmem>>, vector<1x32xf32>
    %6 = vector.shape_cast %5 : vector<1x32xf32> to vector<32xf32>
    %cst = arith.constant dense<0.000000e+00> : vector<8xf32>
    %7 = vector.multi_reduction <add>, %2, %cst [1] : vector<8x32xf32> to vector<8xf32>
    %8 = vector.shape_cast %7 : vector<8xf32> to vector<8x1xf32>
    %cst_6 = arith.constant 3.200000e+01 : f32
    %9 = vector.broadcast %cst_6 : f32 to vector<8x1xf32>
    %10 = arith.divf %8, %9 : vector<8x1xf32>
    %11 = vector.broadcast %10 : vector<8x1xf32> to vector<8x32xf32>
    %12 = arith.subf %2, %11 : vector<8x32xf32>
    %13 = arith.mulf %12, %12 : vector<8x32xf32>
    %cst_7 = arith.constant dense<0.000000e+00> : vector<8xf32>
    %14 = vector.multi_reduction <add>, %13, %cst_7 [1] : vector<8x32xf32> to vector<8xf32>
    %15 = vector.shape_cast %14 : vector<8xf32> to vector<8x1xf32>
    %cst_8 = arith.constant 3.200000e+01 : f32
    %16 = vector.broadcast %cst_8 : f32 to vector<8x1xf32>
    %17 = arith.divf %15, %16 : vector<8x1xf32>
    %18 = vector.broadcast %10 : vector<8x1xf32> to vector<8x32xf32>
    %19 = arith.subf %2, %18 : vector<8x32xf32>
    %cst_9 = arith.constant 9.99999974E-6 : f32
    %20 = vector.broadcast %cst_9 : f32 to vector<8x1xf32>
    %21 = arith.addf %17, %20 : vector<8x1xf32>
    %22 = math.rsqrt %21 : vector<8x1xf32>
    %23 = vector.broadcast %22 : vector<8x1xf32> to vector<8x32xf32>
    %24 = arith.mulf %19, %23 : vector<8x32xf32>
    %25 = vector.shape_cast %4 : vector<32xf32> to vector<1x32xf32>
    %26 = vector.broadcast %25 : vector<1x32xf32> to vector<8x32xf32>
    %27 = arith.mulf %24, %26 : vector<8x32xf32>
    %28 = vector.shape_cast %6 : vector<32xf32> to vector<1x32xf32>
    %29 = vector.broadcast %28 : vector<1x32xf32> to vector<8x32xf32>
    %30 = arith.addf %27, %29 : vector<8x32xf32>
    %31 = arith.truncf %30 : vector<8x32xf32> to vector<8x32xbf16>
    %c0_10 = arith.constant 0 : index
    %c0_11 = arith.constant 0 : index
    %32 = vector.load %arg4[%c0_10, %c0_11] : memref<32x96xbf16, #tpu.memory_space<vmem>>, vector<32x96xbf16>
    %cst_12 = arith.constant dense<0.000000e+00> : vector<8x96xf32>
    %33 = tpu.matmul %31, %32, %cst_12 {dimension_numbers = #tpu.dot_dimension_numbers<[1], [0], [0], [1], [0, 0, 1, 1], [], []>} : vector<8x32xbf16>, vector<32x96xbf16>, vector<8x96xf32> -> vector<8x96xf32>
    %c0_13 = arith.constant 0 : index
    %c0_14 = arith.constant 0 : index
    %34 = vector.load %arg5[%c0_13, %c0_14] : memref<1x96xf32, #tpu.memory_space<vmem>>, vector<1x96xf32>
    %35 = vector.shape_cast %34 : vector<1x96xf32> to vector<96xf32>
    %36 = vector.shape_cast %35 : vector<96xf32> to vector<1x96xf32>
    %37 = vector.broadcast %36 : vector<1x96xf32> to vector<8x96xf32>
    %38 = arith.addf %33, %37 : vector<8x96xf32>
    %39 = vector.extract_strided_slice %38 {offsets = [0, 0], sizes = [8, 32], strides = [1, 1]} : vector<8x96xf32> to vector<8x32xf32>
    %40 = vector.extract_strided_slice %38 {offsets = [0, 32], sizes = [8, 32], strides = [1, 1]} : vector<8x96xf32> to vector<8x32xf32>
    %41 = vector.extract_strided_slice %38 {offsets = [0, 64], sizes = [8, 32], strides = [1, 1]} : vector<8x96xf32> to vector<8x32xf32>
    %42 = vector.extract_strided_slice %39 {offsets = [0, 0], sizes = [8, 8], strides = [1, 1]} : vector<8x32xf32> to vector<8x8xf32>
    %43 = vector.extract_strided_slice %39 {offsets = [0, 8], sizes = [8, 8], strides = [1, 1]} : vector<8x32xf32> to vector<8x8xf32>
    %44 = vector.extract_strided_slice %39 {offsets = [0, 16], sizes = [8, 8], strides = [1, 1]} : vector<8x32xf32> to vector<8x8xf32>
    %45 = vector.extract_strided_slice %39 {offsets = [0, 24], sizes = [8, 8], strides = [1, 1]} : vector<8x32xf32> to vector<8x8xf32>
    %46 = vector.shape_cast %42 : vector<8x8xf32> to vector<1x8x8xf32>
    %47 = vector.shape_cast %43 : vector<8x8xf32> to vector<1x8x8xf32>
    %48 = vector.shape_cast %44 : vector<8x8xf32> to vector<1x8x8xf32>
    %49 = vector.shape_cast %45 : vector<8x8xf32> to vector<1x8x8xf32>
    %50 = tpu.concatenate %46, %47, %48, %49 in 0 : vector<1x8x8xf32>, vector<1x8x8xf32>, vector<1x8x8xf32>, vector<1x8x8xf32> -> vector<4x8x8xf32>
    %51 = arith.truncf %50 : vector<4x8x8xf32> to vector<4x8x8xbf16>
    %52 = vector.extract_strided_slice %40 {offsets = [0, 0], sizes = [8, 8], strides = [1, 1]} : vector<8x32xf32> to vector<8x8xf32>
    %53 = vector.extract_strided_slice %40 {offsets = [0, 8], sizes = [8, 8], strides = [1, 1]} : vector<8x32xf32> to vector<8x8xf32>
    %54 = vector.extract_strided_slice %40 {offsets = [0, 16], sizes = [8, 8], strides = [1, 1]} : vector<8x32xf32> to vector<8x8xf32>
    %55 = vector.extract_strided_slice %40 {offsets = [0, 24], sizes = [8, 8], strides = [1, 1]} : vector<8x32xf32> to vector<8x8xf32>
    %56 = vector.shape_cast %52 : vector<8x8xf32> to vector<1x8x8xf32>
    %57 = vector.shape_cast %53 : vector<8x8xf32> to vector<1x8x8xf32>
    %58 = vector.shape_cast %54 : vector<8x8xf32> to vector<1x8x8xf32>
    %59 = vector.shape_cast %55 : vector<8x8xf32> to vector<1x8x8xf32>
    %60 = tpu.concatenate %56, %57, %58, %59 in 0 : vector<1x8x8xf32>, vector<1x8x8xf32>, vector<1x8x8xf32>, vector<1x8x8xf32> -> vector<4x8x8xf32>
    %61 = arith.truncf %60 : vector<4x8x8xf32> to vector<4x8x8xbf16>
    %62 = vector.extract_strided_slice %41 {offsets = [0, 0], sizes = [8, 8], strides = [1, 1]} : vector<8x32xf32> to vector<8x8xf32>
    %63 = vector.extract_strided_slice %41 {offsets = [0, 8], sizes = [8, 8], strides = [1, 1]} : vector<8x32xf32> to vector<8x8xf32>
    %64 = vector.extract_strided_slice %41 {offsets = [0, 16], sizes = [8, 8], strides = [1, 1]} : vector<8x32xf32> to vector<8x8xf32>
    %65 = vector.extract_strided_slice %41 {offsets = [0, 24], sizes = [8, 8], strides = [1, 1]} : vector<8x32xf32> to vector<8x8xf32>
    %66 = vector.shape_cast %62 : vector<8x8xf32> to vector<1x8x8xf32>
    %67 = vector.shape_cast %63 : vector<8x8xf32> to vector<1x8x8xf32>
    %68 = vector.shape_cast %64 : vector<8x8xf32> to vector<1x8x8xf32>
    %69 = vector.shape_cast %65 : vector<8x8xf32> to vector<1x8x8xf32>
    %70 = tpu.concatenate %66, %67, %68, %69 in 0 : vector<1x8x8xf32>, vector<1x8x8xf32>, vector<1x8x8xf32>, vector<1x8x8xf32> -> vector<4x8x8xf32>
    %71 = arith.truncf %70 : vector<4x8x8xf32> to vector<4x8x8xbf16>
    "tpu.trace_start"() <{level = 10 : i32, message = "hqd,hkd->hqk"}> : () -> ()
    %cst_15 = arith.constant dense<0.000000e+00> : vector<4x8x8xf32>
    %72 = tpu.matmul %51, %61, %cst_15 {dimension_numbers = #tpu.dot_dimension_numbers<[2], [2], [1], [1], [0, 0, 0, 1, 1, 1], [0], [0]>} : vector<4x8x8xbf16>, vector<4x8x8xbf16>, vector<4x8x8xf32> -> vector<4x8x8xf32>
    "tpu.trace_stop"() : () -> ()
    %cst_16 = arith.constant 0.353553385 : f32
    %73 = vector.broadcast %cst_16 : f32 to vector<4x8x8xf32>
    %74 = arith.mulf %72, %73 : vector<4x8x8xf32>
    %75 = tpu.iota {dimensions = array<i32: 1>} : vector<4x8x8xi32>
    %76 = tpu.iota {dimensions = array<i32: 2>} : vector<4x8x8xi32>
    %77 = arith.cmpi sge, %75, %76 : vector<4x8x8xi32>
    %cst_17 = arith.constant 0xFF800000 : f32
    %78 = vector.broadcast %cst_17 : f32 to vector<4x8x8xf32>
    %79 = arith.select %77, %74, %78 : vector<4x8x8xi1>, vector<4x8x8xf32>
    %cst_18 = arith.constant dense<0xFF800000> : vector<4x8xf32>
    %80 = vector.multi_reduction <maximumf>, %79, %cst_18 [2] : vector<4x8x8xf32> to vector<4x8xf32>
    %81 = vector.shape_cast %80 : vector<4x8xf32> to vector<4x8x1xf32>
    %82 = vector.broadcast %81 : vector<4x8x1xf32> to vector<4x8x8xf32>
    %83 = arith.subf %79, %82 : vector<4x8x8xf32>
    %84 = math.exp %83 : vector<4x8x8xf32>
    %cst_19 = arith.constant dense<0.000000e+00> : vector<4x8xf32>
    %85 = vector.multi_reduction <add>, %84, %cst_19 [2] : vector<4x8x8xf32> to vector<4x8xf32>
    %86 = vector.shape_cast %85 : vector<4x8xf32> to vector<4x8x1xf32>
    %87 = tpu.reciprocal %86 {approx = true} : vector<4x8x1xf32> -> vector<4x8x1xf32>
    %88 = vector.broadcast %87 : vector<4x8x1xf32> to vector<4x8x8xf32>
    %89 = arith.mulf %84, %88 : vector<4x8x8xf32>
    %90 = arith.truncf %89 : vector<4x8x8xf32> to vector<4x8x8xbf16>
    "tpu.trace_start"() <{level = 10 : i32, message = "hqk,hkd->hqd"}> : () -> ()
    %cst_20 = arith.constant dense<0.000000e+00> : vector<4x8x8xf32>
    %91 = tpu.matmul %90, %71, %cst_20 {dimension_numbers = #tpu.dot_dimension_numbers<[2], [1], [1], [2], [0, 0, 0, 1, 1, 2], [0], [0]>} : vector<4x8x8xbf16>, vector<4x8x8xbf16>, vector<4x8x8xf32> -> vector<4x8x8xf32>
    "tpu.trace_stop"() : () -> ()
    %92 = vector.extract_strided_slice %91 {offsets = [0, 0, 0], sizes = [1, 8, 8], strides = [1, 1, 1]} : vector<4x8x8xf32> to vector<1x8x8xf32>
    %93 = vector.shape_cast %92 : vector<1x8x8xf32> to vector<8x8xf32>
    %94 = vector.extract_strided_slice %91 {offsets = [1, 0, 0], sizes = [1, 8, 8], strides = [1, 1, 1]} : vector<4x8x8xf32> to vector<1x8x8xf32>
    %95 = vector.shape_cast %94 : vector<1x8x8xf32> to vector<8x8xf32>
    %96 = vector.extract_strided_slice %91 {offsets = [2, 0, 0], sizes = [1, 8, 8], strides = [1, 1, 1]} : vector<4x8x8xf32> to vector<1x8x8xf32>
    %97 = vector.shape_cast %96 : vector<1x8x8xf32> to vector<8x8xf32>
    %98 = vector.extract_strided_slice %91 {offsets = [3, 0, 0], sizes = [1, 8, 8], strides = [1, 1, 1]} : vector<4x8x8xf32> to vector<1x8x8xf32>
    %99 = vector.shape_cast %98 : vector<1x8x8xf32> to vector<8x8xf32>
    %100 = tpu.concatenate %93, %95, %97, %99 in 1 : vector<8x8xf32>, vector<8x8xf32>, vector<8x8xf32>, vector<8x8xf32> -> vector<8x32xf32>
    %101 = arith.truncf %100 : vector<8x32xf32> to vector<8x32xbf16>
    %c0_21 = arith.constant 0 : index
    %c0_22 = arith.constant 0 : index
    %102 = vector.load %arg6[%c0_21, %c0_22] : memref<32x32xbf16, #tpu.memory_space<vmem>>, vector<32x32xbf16>
    %cst_23 = arith.constant dense<0.000000e+00> : vector<8x32xf32>
    %103 = tpu.matmul %101, %102, %cst_23 {dimension_numbers = #tpu.dot_dimension_numbers<[1], [0], [0], [1], [0, 0, 1, 1], [], []>} : vector<8x32xbf16>, vector<32x32xbf16>, vector<8x32xf32> -> vector<8x32xf32>
    %c0_24 = arith.constant 0 : index
    %c0_25 = arith.constant 0 : index
    %104 = vector.load %arg7[%c0_24, %c0_25] : memref<1x32xf32, #tpu.memory_space<vmem>>, vector<1x32xf32>
    %105 = vector.shape_cast %104 : vector<1x32xf32> to vector<32xf32>
    %106 = vector.shape_cast %105 : vector<32xf32> to vector<1x32xf32>
    %107 = vector.broadcast %106 : vector<1x32xf32> to vector<8x32xf32>
    %108 = arith.addf %103, %107 : vector<8x32xf32>
    %109 = arith.addf %2, %108 : vector<8x32xf32>
    %c0_26 = arith.constant 0 : index
    %c0_27 = arith.constant 0 : index
    %110 = vector.load %arg8[%c0_26, %c0_27] : memref<1x32xf32, #tpu.memory_space<vmem>>, vector<1x32xf32>
    %111 = vector.shape_cast %110 : vector<1x32xf32> to vector<32xf32>
    %c0_28 = arith.constant 0 : index
    %c0_29 = arith.constant 0 : index
    %112 = vector.load %arg9[%c0_28, %c0_29] : memref<1x32xf32, #tpu.memory_space<vmem>>, vector<1x32xf32>
    %113 = vector.shape_cast %112 : vector<1x32xf32> to vector<32xf32>
    %cst_30 = arith.constant dense<0.000000e+00> : vector<8xf32>
    %114 = vector.multi_reduction <add>, %109, %cst_30 [1] : vector<8x32xf32> to vector<8xf32>
    %115 = vector.shape_cast %114 : vector<8xf32> to vector<8x1xf32>
    %cst_31 = arith.constant 3.200000e+01 : f32
    %116 = vector.broadcast %cst_31 : f32 to vector<8x1xf32>
    %117 = arith.divf %115, %116 : vector<8x1xf32>
    %118 = vector.broadcast %117 : vector<8x1xf32> to vector<8x32xf32>
    %119 = arith.subf %109, %118 : vector<8x32xf32>
    %120 = arith.mulf %119, %119 : vector<8x32xf32>
    %cst_32 = arith.constant dense<0.000000e+00> : vector<8xf32>
    %121 = vector.multi_reduction <add>, %120, %cst_32 [1] : vector<8x32xf32> to vector<8xf32>
    %122 = vector.shape_cast %121 : vector<8xf32> to vector<8x1xf32>
    %cst_33 = arith.constant 3.200000e+01 : f32
    %123 = vector.broadcast %cst_33 : f32 to vector<8x1xf32>
    %124 = arith.divf %122, %123 : vector<8x1xf32>
    %125 = vector.broadcast %117 : vector<8x1xf32> to vector<8x32xf32>
    %126 = arith.subf %109, %125 : vector<8x32xf32>
    %cst_34 = arith.constant 9.99999974E-6 : f32
    %127 = vector.broadcast %cst_34 : f32 to vector<8x1xf32>
    %128 = arith.addf %124, %127 : vector<8x1xf32>
    %129 = math.rsqrt %128 : vector<8x1xf32>
    %130 = vector.broadcast %129 : vector<8x1xf32> to vector<8x32xf32>
    %131 = arith.mulf %126, %130 : vector<8x32xf32>
    %132 = vector.shape_cast %111 : vector<32xf32> to vector<1x32xf32>
    %133 = vector.broadcast %132 : vector<1x32xf32> to vector<8x32xf32>
    %134 = arith.mulf %131, %133 : vector<8x32xf32>
    %135 = vector.shape_cast %113 : vector<32xf32> to vector<1x32xf32>
    %136 = vector.broadcast %135 : vector<1x32xf32> to vector<8x32xf32>
    %137 = arith.addf %134, %136 : vector<8x32xf32>
    %138 = arith.truncf %137 : vector<8x32xf32> to vector<8x32xbf16>
    %c0_35 = arith.constant 0 : index
    %c0_36 = arith.constant 0 : index
    %139 = vector.load %arg10[%c0_35, %c0_36] : memref<32x128xbf16, #tpu.memory_space<vmem>>, vector<32x128xbf16>
    %cst_37 = arith.constant dense<0.000000e+00> : vector<8x128xf32>
    %140 = tpu.matmul %138, %139, %cst_37 {dimension_numbers = #tpu.dot_dimension_numbers<[1], [0], [0], [1], [0, 0, 1, 1], [], []>} : vector<8x32xbf16>, vector<32x128xbf16>, vector<8x128xf32> -> vector<8x128xf32>
    %c0_38 = arith.constant 0 : index
    %c0_39 = arith.constant 0 : index
    %141 = vector.load %arg11[%c0_38, %c0_39] : memref<1x128xf32, #tpu.memory_space<vmem>>, vector<1x128xf32>
    %142 = vector.shape_cast %141 : vector<1x128xf32> to vector<128xf32>
    %143 = vector.shape_cast %142 : vector<128xf32> to vector<1x128xf32>
    %144 = vector.broadcast %143 : vector<1x128xf32> to vector<8x128xf32>
    %145 = arith.addf %140, %144 : vector<8x128xf32>
    %cst_40 = arith.constant 5.000000e-01 : f32
    %146 = vector.broadcast %cst_40 : f32 to vector<8x128xf32>
    %147 = arith.mulf %146, %145 : vector<8x128xf32>
    %cst_41 = arith.constant 4.471500e-02 : f32
    %148 = vector.broadcast %cst_41 : f32 to vector<8x128xf32>
    %149 = arith.mulf %148, %145 : vector<8x128xf32>
    %150 = arith.mulf %149, %145 : vector<8x128xf32>
    %151 = arith.mulf %150, %145 : vector<8x128xf32>
    %152 = arith.addf %145, %151 : vector<8x128xf32>
    %cst_42 = arith.constant 0.797884583 : f32
    %153 = vector.broadcast %cst_42 : f32 to vector<8x128xf32>
    %154 = arith.mulf %153, %152 : vector<8x128xf32>
    %155 = math.tanh %154 : vector<8x128xf32>
    %cst_43 = arith.constant 1.000000e+00 : f32
    %156 = vector.broadcast %cst_43 : f32 to vector<8x128xf32>
    %157 = arith.addf %156, %155 : vector<8x128xf32>
    %158 = arith.mulf %147, %157 : vector<8x128xf32>
    %159 = arith.truncf %158 : vector<8x128xf32> to vector<8x128xbf16>
    %c0_44 = arith.constant 0 : index
    %c0_45 = arith.constant 0 : index
    %160 = vector.load %arg12[%c0_44, %c0_45] : memref<128x32xbf16, #tpu.memory_space<vmem>>, vector<128x32xbf16>
    %cst_46 = arith.constant dense<0.000000e+00> : vector<8x32xf32>
    %161 = tpu.matmul %159, %160, %cst_46 {dimension_numbers = #tpu.dot_dimension_numbers<[1], [0], [0], [1], [0, 0, 1, 1], [], []>} : vector<8x128xbf16>, vector<128x32xbf16>, vector<8x32xf32> -> vector<8x32xf32>
    %c0_47 = arith.constant 0 : index
    %c0_48 = arith.constant 0 : index
    %162 = vector.load %arg13[%c0_47, %c0_48] : memref<1x32xf32, #tpu.memory_space<vmem>>, vector<1x32xf32>
    %163 = vector.shape_cast %162 : vector<1x32xf32> to vector<32xf32>
    %164 = vector.shape_cast %163 : vector<32xf32> to vector<1x32xf32>
    %165 = vector.broadcast %164 : vector<1x32xf32> to vector<8x32xf32>
    %166 = arith.addf %161, %165 : vector<8x32xf32>
    %167 = arith.addf %109, %166 : vector<8x32xf32>
    %168 = arith.truncf %167 : vector<8x32xf32> to vector<8x32xbf16>
    %c0_49 = arith.constant 0 : index
    %c0_50 = arith.constant 0 : index
    %c0_51 = arith.constant 0 : index
    %169 = vector.load %arg14[%c0_49, %c0_50, %c0_51] : memref<1x8x32xbf16, #tpu.memory_space<vmem>>, vector<1x8x32xbf16>
    %170 = vector.shape_cast %169 : vector<1x8x32xbf16> to vector<8x32xbf16>
    %171 = vector.shape_cast %168 : vector<8x32xbf16> to vector<1x8x32xbf16>
    tpu.vector_store %arg14[%c0_49, %c0_50, %c0_51], %171 {strides = array<i32>} : memref<1x8x32xbf16, #tpu.memory_space<vmem>>, vector<1x8x32xbf16>,
    return
  }
  func.func @transform_0(%arg0: i32) -> (i32, i32, i32) {
    %c0_i32 = arith.constant 0 : i32
    %c0_i32_0 = arith.constant 0 : i32
    %c0_i32_1 = arith.constant 0 : i32
    return %arg0, %c0_i32, %c0_i32_0 : i32, i32, i32
  }
  func.func @transform_1(%arg0: i32) -> (i32, i32) {
    %c0_i32 = arith.constant 0 : i32
    %c0_i32_0 = arith.constant 0 : i32
    %c0_i32_1 = arith.constant 0 : i32
    return %c0_i32, %c0_i32_0 : i32, i32
  }
  func.func @transform_2(%arg0: i32) -> (i32, i32) {
    %c0_i32 = arith.constant 0 : i32
    %c0_i32_0 = arith.constant 0 : i32
    %c0_i32_1 = arith.constant 0 : i32
    return %c0_i32, %c0_i32_0 : i32, i32
  }
  func.func @transform_3(%arg0: i32) -> (i32, i32) {
    %c0_i32 = arith.constant 0 : i32
    %c0_i32_0 = arith.constant 0 : i32
    %c0_i32_1 = arith.constant 0 : i32
    return %c0_i32, %c0_i32_0 : i32, i32
  }
  func.func @transform_4(%arg0: i32) -> (i32, i32) {
    %c0_i32 = arith.constant 0 : i32
    %c0_i32_0 = arith.constant 0 : i32
    %c0_i32_1 = arith.constant 0 : i32
    return %c0_i32, %c0_i32_0 : i32, i32
  }
  func.func @transform_5(%arg0: i32) -> (i32, i32) {
    %c0_i32 = arith.constant 0 : i32
    %c0_i32_0 = arith.constant 0 : i32
    %c0_i32_1 = arith.constant 0 : i32
    return %c0_i32, %c0_i32_0 : i32, i32
  }
  func.func @transform_6(%arg0: i32) -> (i32, i32) {
    %c0_i32 = arith.constant 0 : i32
    %c0_i32_0 = arith.constant 0 : i32
    %c0_i32_1 = arith.constant 0 : i32
    return %c0_i32, %c0_i32_0 : i32, i32
  }
  func.func @transform_7(%arg0: i32) -> (i32, i32) {
    %c0_i32 = arith.constant 0 : i32
    %c0_i32_0 = arith.constant 0 : i32
    %c0_i32_1 = arith.constant 0 : i32
    return %c0_i32, %c0_i32_0 : i32, i32
  }
  func.func @transform_8(%arg0: i32) -> (i32, i32) {
    %c0_i32 = arith.constant 0 : i32
    %c0_i32_0 = arith.constant 0 : i32
    %c0_i32_1 = arith.constant 0 : i32
    return %c0_i32, %c0_i32_0 : i32, i32
  }
  func.func @transform_9(%arg0: i32) -> (i32, i32) {
    %c0_i32 = arith.constant 0 : i32
    %c0_i32_0 = arith.constant 0 : i32
    %c0_i32_1 = arith.constant 0 : i32
    return %c0_i32, %c0_i32_0 : i32, i32
  }
  func.func @transform_10(%arg0: i32) -> (i32, i32) {
    %c0_i32 = arith.constant 0 : i32
    %c0_i32_0 = arith.constant 0 : i32
    %c0_i32_1 = arith.constant 0 : i32
    return %c0_i32, %c0_i32_0 : i32, i32
  }
  func.func @transform_11(%arg0: i32) -> (i32, i32) {
    %c0_i32 = arith.constant 0 : i32
    %c0_i32_0 = arith.constant 0 : i32
    %c0_i32_1 = arith.constant 0 : i32
    return %c0_i32, %c0_i32_0 : i32, i32
  }
  func.func @transform_12(%arg0: i32) -> (i32, i32) {
    %c0_i32 = arith.constant 0 : i32
    %c0_i32_0 = arith.constant 0 : i32
    %c0_i32_1 = arith.constant 0 : i32
    return %c0_i32, %c0_i32_0 : i32, i32
  }
  func.func @transform_13(%arg0: i32) -> (i32, i32, i32) {
    %c0_i32 = arith.constant 0 : i32
    %c0_i32_0 = arith.constant 0 : i32
    %c0_i32_1 = arith.constant 0 : i32
    return %arg0, %c0_i32, %c0_i32_0 : i32, i32, i32
  }
}

</mosaic_0001>

<llo_original>
// kernel: tpu_custom_call.1
$region0: #{tpu_custom_call.1}
  #allocation0 [shape = 'u32[]', space=smem, size = 0x4, offset = 0x4, fixed_abs, tag = 'smem constant byte address 0x4 - core index']
  #allocation1 [shape = 'u32[144,128]{1,0:T(1,128)}', space=vmem, size = 0x12000, scoped, tag = 'internal scratch']
  %s0 = inlined_call_operand.hbm [shape: bf16[2,8,32], index: 0, kind: input, shape index: {}]
  %s1 = inlined_call_operand.hbm [shape: f32[1,32], index: 1, kind: input, shape index: {}]
  %s2 = inlined_call_operand.hbm [shape: f32[1,32], index: 2, kind: input, shape index: {}]
  %s3 = inlined_call_operand.hbm [shape: bf16[32,96], index: 3, kind: input, shape index: {}]
  %s4 = inlined_call_operand.hbm [shape: f32[1,96], index: 4, kind: input, shape index: {}]
  %s5 = inlined_call_operand.hbm [shape: bf16[32,32], index: 5, kind: input, shape index: {}]
  %s6 = inlined_call_operand.hbm [shape: f32[1,32], index: 6, kind: input, shape index: {}]
  %s7 = inlined_call_operand.hbm [shape: f32[1,32], index: 7, kind: input, shape index: {}]
  %s8 = inlined_call_operand.hbm [shape: f32[1,32], index: 8, kind: input, shape index: {}]
  %s9 = inlined_call_operand.hbm [shape: bf16[32,128], index: 9, kind: input, shape index: {}]
  %s10 = inlined_call_operand.hbm [shape: f32[1,128], index: 10, kind: input, shape index: {}]
  %s11 = inlined_call_operand.hbm [shape: bf16[128,32], index: 11, kind: input, shape index: {}]
  %s12 = inlined_call_operand.hbm [shape: f32[1,32], index: 12, kind: input, shape index: {}]
  %s13 = inlined_call_operand.hbm [shape: bf16[2,8,32], index: 13, kind: output, shape index: {}]
  %s14 = sld [smem:[#allocation0]]
  $region137: #{tpu_custom_call.1} parent=0
    _
  %s16 = ssub.s32 1, %s14
  %s17 = scalar_select 0, %s16, %s14
  $region1: #{tpu_custom_call.1} parent=0
    #allocation2 [shape = 'u8[4096]{0}', space=vmem, size = 0x1000, scoped, tag = 'input window, operand 0']
    #allocation3 [shape = 's32[2]{0}', space=sflag, size = 0x8, scoped, tag = 'scoped memory for tpu_custom_call.1']
    #allocation4 [shape = 's32[2]{0}', space=sflag, size = 0x8, scoped, tag = 'scoped memory for tpu_custom_call.1']
    #allocation5 [shape = 'u8[512]{0}', space=vmem, size = 0x400, scoped, tag = 'input window, operand 1, single buffered']
    #allocation6 [shape = 's32[1]{0}', space=sflag, size = 0x4, scoped, tag = 'scoped memory for tpu_custom_call.1']
    #allocation7 [shape = 'u8[512]{0}', space=vmem, size = 0x400, scoped, tag = 'input window, operand 2, single buffered']
    #allocation8 [shape = 'u8[8192]{0}', space=vmem, size = 0x2000, scoped, tag = 'input window, operand 3, single buffered']
    #allocation9 [shape = 's32[1]{0}', space=sflag, size = 0x4, scoped, tag = 'scoped memory for tpu_custom_call.1']
    #allocation10 [shape = 'u8[512]{0}', space=vmem, size = 0x400, scoped, tag = 'input window, operand 4, single buffered']
    #allocation11 [shape = 'u8[8192]{0}', space=vmem, size = 0x2000, scoped, tag = 'input window, operand 5, single buffered']
    #allocation12 [shape = 's32[1]{0}', space=sflag, size = 0x4, scoped, tag = 'scoped memory for tpu_custom_call.1']
    #allocation13 [shape = 'u8[512]{0}', space=vmem, size = 0x400, scoped, tag = 'input window, operand 6, single buffered']
    #allocation14 [shape = 'u8[512]{0}', space=vmem, size = 0x400, scoped, tag = 'input window, operand 7, single buffered']
    #allocation15 [shape = 's32[1]{0}', space=sflag, size = 0x4, scoped, tag = 'scoped memory for tpu_custom_call.1']
    #allocation16 [shape = 'u8[512]{0}', space=vmem, size = 0x400, scoped, tag = 'input window, operand 8, single buffered']
    #allocation17 [shape = 'u8[8192]{0}', space=vmem, size = 0x2000, scoped, tag = 'input window, operand 9, single buffered']
    #allocation18 [shape = 's32[1]{0}', space=sflag, size = 0x4, scoped, tag = 'scoped memory for tpu_custom_call.1']
    #allocation19 [shape = 'u8[512]{0}', space=vmem, size = 0x400, scoped, tag = 'input window, operand 10, single buffered']
    #allocation20 [shape = 'u8[32768]{0}', space=vmem, size = 0x8000, scoped, tag = 'input window, operand 11, single buffered']
    #allocation21 [shape = 's32[1]{0}', space=sflag, size = 0x4, scoped, tag = 'scoped memory for tpu_custom_call.1']
    #allocation22 [shape = 'u8[512]{0}', space=vmem, size = 0x400, scoped, tag = 'input window, operand 12, single buffered']
    #allocation23 [shape = 'u8[4096]{0}', space=vmem, size = 0x1000, scoped, tag = 'output window, operand 0']
    %18 = vsyncpa [#allocation3], 0
    %s19 = scalar_lea.sflag [#allocation3], 1
    %20 = vsyncpa %s19, 0
    %21 = vsyncpa [#allocation6], 0
    %22 = vsyncpa [#allocation9], 0
    %23 = vsyncpa [#allocation12], 0
    %24 = vsyncpa [#allocation15], 0
    %25 = vsyncpa [#allocation18], 0
    %26 = vsyncpa [#allocation21], 0
    %27 = vsyncpa [#allocation4], 0
    %s28 = scalar_lea.sflag [#allocation4], 1
    %29 = vsyncpa %s28, 0
    loop: start=0, step=1, limit=4
    $region2: #{tpu_custom_call.1} parent=1 // loop_pre_header
      _
    $region3: #{tpu_custom_call.1} parent=1 // loop_header
      %s31 = sphi 0, %s35
      %p32 = scmp.ge.s32.totalorder %s31, 4
      %s41 = sphi 0, %s43
      %s44 = sphi 0, %s41
      %s45 = sphi 0, %s44
      %s61 = sphi 0, %s45
      %s65 = sphi 0, %s65
      %s67 = sphi 0, %s65
      %s68 = sphi 0, %s67
      %s82 = sphi 0, %s68
      %s86 = sphi 0, %s86
      %s88 = sphi 0, %s86
      %s89 = sphi 0, %s88
      %s103 = sphi 0, %s89
      %s107 = sphi 0, %s107
      %s109 = sphi 0, %s107
      %s110 = sphi 0, %s109
      %s124 = sphi 0, %s110
      %s128 = sphi 0, %s128
      %s130 = sphi 0, %s128
      %s131 = sphi 0, %s130
      %s145 = sphi 0, %s131
      %s149 = sphi 0, %s149
      %s151 = sphi 0, %s149
      %s152 = sphi 0, %s151
      %s166 = sphi 0, %s152
      %s170 = sphi 0, %s170
      %s172 = sphi 0, %s170
      %s173 = sphi 0, %s172
      %s187 = sphi 0, %s173
      %s191 = sphi 0, %s191
      %s193 = sphi 0, %s191
      %s194 = sphi 0, %s193
      %s208 = sphi 0, %s194
      %s212 = sphi 0, %s212
      %s214 = sphi 0, %s212
      %s215 = sphi 0, %s214
      %s229 = sphi 0, %s215
      %s233 = sphi 0, %s233
      %s235 = sphi 0, %s233
      %s236 = sphi 0, %s235
      %s250 = sphi 0, %s236
      %s254 = sphi 0, %s254
      %s256 = sphi 0, %s254
      %s257 = sphi 0, %s256
      %s271 = sphi 0, %s257
      %s275 = sphi 0, %s275
      %s277 = sphi 0, %s275
      %s278 = sphi 0, %s277
      %s292 = sphi 0, %s278
      %s296 = sphi 0, %s296
      %s298 = sphi 0, %s296
      %s299 = sphi 0, %s298
      %s313 = sphi 0, %s299
      %s319 = sphi 0, %s321
      %s322 = sphi 0, %s319
      %s323 = sphi 0, %s322
      %s339 = sphi 0, %s323
    $region4: #{tpu_custom_call.1} parent=1 // loop_header_branch
      %34 = sbr.rel (%p32) target = $region8
    $region5: #{tpu_custom_call.1} parent=1 // loop_body
      %s36 = ssub.s32 %s31, 1
      %s37 = ssub.s32 %s31, 2
      %s38 = sadd.s32 %s31, 1
      %s39 = ssub.s32 %s31, %s38
      %p40 = scmp.eq.s32.totalorder %s39, 0
      %s42 = sadd.s32 %s41, 1
      %s43 = scalar_select %p40, %s41, %s42
      %p46 = pneg %p40
      %p47 = scmp.eq.s32.totalorder %s31, 1
      %p48 = por %p46, %p47
      %p49 = scmp.ne.s32.totalorder %s41, %s44
      %p50 = scmp.eq.s32.totalorder %s31, 0
      %p51 = por %p49, %p50
      %p52 = scmp.ne.s32.totalorder %s41, %s44
      %p53 = scmp.eq.s32.totalorder %s36, 1
      %p54 = por %p52, %p53
      %p55 = scmp.ne.s32.totalorder %s44, %s45
      %p56 = scmp.eq.s32.totalorder %s36, 0
      %p57 = por %p55, %p56
      %p58 = scmp.ne.s32.totalorder %s44, %s45
      %p59 = scmp.eq.s32.totalorder %s37, 1
      %p60 = por %p58, %p59
      %p62 = scmp.ne.s32.totalorder %s45, %s61
      %p63 = scmp.eq.s32.totalorder %s37, 0
      %p64 = por %p62, %p63
      %s66 = sadd.s32 %s65, 1
      %p69 = scmp.eq.s32.totalorder %s31, 1
      %p70 = scmp.ne.s32.totalorder %s65, %s67
      %p71 = scmp.eq.s32.totalorder %s31, 0
      %p72 = por %p70, %p71
      %p73 = scmp.ne.s32.totalorder %s65, %s67
      %p74 = scmp.eq.s32.totalorder %s36, 1
      %p75 = por %p73, %p74
      %p76 = scmp.ne.s32.totalorder %s67, %s68
      %p77 = scmp.eq.s32.totalorder %s36, 0
      %p78 = por %p76, %p77
      %p79 = scmp.ne.s32.totalorder %s67, %s68
      %p80 = scmp.eq.s32.totalorder %s37, 1
      %p81 = por %p79, %p80
      %p83 = scmp.ne.s32.totalorder %s68, %s82
      %p84 = scmp.eq.s32.totalorder %s37, 0
      %p85 = por %p83, %p84
      %s87 = sadd.s32 %s86, 1
      %p90 = scmp.eq.s32.totalorder %s31, 1
      %p91 = scmp.ne.s32.totalorder %s86, %s88
      %p92 = scmp.eq.s32.totalorder %s31, 0
      %p93 = por %p91, %p92
      %p94 = scmp.ne.s32.totalorder %s86, %s88
      %p95 = scmp.eq.s32.totalorder %s36, 1
      %p96 = por %p94, %p95
      %p97 = scmp.ne.s32.totalorder %s88, %s89
      %p98 = scmp.eq.s32.totalorder %s36, 0
      %p99 = por %p97, %p98
      %p100 = scmp.ne.s32.totalorder %s88, %s89
      %p101 = scmp.eq.s32.totalorder %s37, 1
      %p102 = por %p100, %p101
      %p104 = scmp.ne.s32.totalorder %s89, %s103
      %p105 = scmp.eq.s32.totalorder %s37, 0
      %p106 = por %p104, %p105
      %s108 = sadd.s32 %s107, 1
      %p111 = scmp.eq.s32.totalorder %s31, 1
      %p112 = scmp.ne.s32.totalorder %s107, %s109
      %p113 = scmp.eq.s32.totalorder %s31, 0
      %p114 = por %p112, %p113
      %p115 = scmp.ne.s32.totalorder %s107, %s109
      %p116 = scmp.eq.s32.totalorder %s36, 1
      %p117 = por %p115, %p116
      %p118 = scmp.ne.s32.totalorder %s109, %s110
      %p119 = scmp.eq.s32.totalorder %s36, 0
      %p120 = por %p118, %p119
      %p121 = scmp.ne.s32.totalorder %s109, %s110
      %p122 = scmp.eq.s32.totalorder %s37, 1
      %p123 = por %p121, %p122
      %p125 = scmp.ne.s32.totalorder %s110, %s124
      %p126 = scmp.eq.s32.totalorder %s37, 0
      %p127 = por %p125, %p126
      %s129 = sadd.s32 %s128, 1
      %p132 = scmp.eq.s32.totalorder %s31, 1
      %p133 = scmp.ne.s32.totalorder %s128, %s130
      %p134 = scmp.eq.s32.totalorder %s31, 0
      %p135 = por %p133, %p134
      %p136 = scmp.ne.s32.totalorder %s128, %s130
      %p137 = scmp.eq.s32.totalorder %s36, 1
      %p138 = por %p136, %p137
      %p139 = scmp.ne.s32.totalorder %s130, %s131
      %p140 = scmp.eq.s32.totalorder %s36, 0
      %p141 = por %p139, %p140
      %p142 = scmp.ne.s32.totalorder %s130, %s131
      %p143 = scmp.eq.s32.totalorder %s37, 1
      %p144 = por %p142, %p143
      %p146 = scmp.ne.s32.totalorder %s131, %s145
      %p147 = scmp.eq.s32.totalorder %s37, 0
      %p148 = por %p146, %p147
      %s150 = sadd.s32 %s149, 1
      %p153 = scmp.eq.s32.totalorder %s31, 1
      %p154 = scmp.ne.s32.totalorder %s149, %s151
      %p155 = scmp.eq.s32.totalorder %s31, 0
      %p156 = por %p154, %p155
      %p157 = scmp.ne.s32.totalorder %s149, %s151
      %p158 = scmp.eq.s32.totalorder %s36, 1
      %p159 = por %p157, %p158
      %p160 = scmp.ne.s32.totalorder %s151, %s152
      %p161 = scmp.eq.s32.totalorder %s36, 0
      %p162 = por %p160, %p161
      %p163 = scmp.ne.s32.totalorder %s151, %s152
      %p164 = scmp.eq.s32.totalorder %s37, 1
      %p165 = por %p163, %p164
      %p167 = scmp.ne.s32.totalorder %s152, %s166
      %p168 = scmp.eq.s32.totalorder %s37, 0
      %p169 = por %p167, %p168
      %s171 = sadd.s32 %s170, 1
      %p174 = scmp.eq.s32.totalorder %s31, 1
      %p175 = scmp.ne.s32.totalorder %s170, %s172
      %p176 = scmp.eq.s32.totalorder %s31, 0
      %p177 = por %p175, %p176
      %p178 = scmp.ne.s32.totalorder %s170, %s172
      %p179 = scmp.eq.s32.totalorder %s36, 1
      %p180 = por %p178, %p179
      %p181 = scmp.ne.s32.totalorder %s172, %s173
      %p182 = scmp.eq.s32.totalorder %s36, 0
      %p183 = por %p181, %p182
      %p184 = scmp.ne.s32.totalorder %s172, %s173
      %p185 = scmp.eq.s32.totalorder %s37, 1
      %p186 = por %p184, %p185
      %p188 = scmp.ne.s32.totalorder %s173, %s187
      %p189 = scmp.eq.s32.totalorder %s37, 0
      %p190 = por %p188, %p189
      %s192 = sadd.s32 %s191, 1
      %p195 = scmp.eq.s32.totalorder %s31, 1
      %p196 = scmp.ne.s32.totalorder %s191, %s193
      %p197 = scmp.eq.s32.totalorder %s31, 0
      %p198 = por %p196, %p197
      %p199 = scmp.ne.s32.totalorder %s191, %s193
      %p200 = scmp.eq.s32.totalorder %s36, 1
      %p201 = por %p199, %p200
      %p202 = scmp.ne.s32.totalorder %s193, %s194
      %p203 = scmp.eq.s32.totalorder %s36, 0
      %p204 = por %p202, %p203
      %p205 = scmp.ne.s32.totalorder %s193, %s194
      %p206 = scmp.eq.s32.totalorder %s37, 1
      %p207 = por %p205, %p206
      %p209 = scmp.ne.s32.totalorder %s194, %s208
      %p210 = scmp.eq.s32.totalorder %s37, 0
      %p211 = por %p209, %p210
      %s213 = sadd.s32 %s212, 1
      %p216 = scmp.eq.s32.totalorder %s31, 1
      %p217 = scmp.ne.s32.totalorder %s212, %s214
      %p218 = scmp.eq.s32.totalorder %s31, 0
      %p219 = por %p217, %p218
      %p220 = scmp.ne.s32.totalorder %s212, %s214
      %p221 = scmp.eq.s32.totalorder %s36, 1
      %p222 = por %p220, %p221
      %p223 = scmp.ne.s32.totalorder %s214, %s215
      %p224 = scmp.eq.s32.totalorder %s36, 0
      %p225 = por %p223, %p224
      %p226 = scmp.ne.s32.totalorder %s214, %s215
      %p227 = scmp.eq.s32.totalorder %s37, 1
      %p228 = por %p226, %p227
      %p230 = scmp.ne.s32.totalorder %s215, %s229
      %p231 = scmp.eq.s32.totalorder %s37, 0
      %p232 = por %p230, %p231
      %s234 = sadd.s32 %s233, 1
      %p237 = scmp.eq.s32.totalorder %s31, 1
      %p238 = scmp.ne.s32.totalorder %s233, %s235
      %p239 = scmp.eq.s32.totalorder %s31, 0
      %p240 = por %p238, %p239
      %p241 = scmp.ne.s32.totalorder %s233, %s235
      %p242 = scmp.eq.s32.totalorder %s36, 1
      %p243 = por %p241, %p242
      %p244 = scmp.ne.s32.totalorder %s235, %s236
      %p245 = scmp.eq.s32.totalorder %s36, 0
      %p246 = por %p244, %p245
      %p247 = scmp.ne.s32.totalorder %s235, %s236
      %p248 = scmp.eq.s32.totalorder %s37, 1
      %p249 = por %p247, %p248
      %p251 = scmp.ne.s32.totalorder %s236, %s250
      %p252 = scmp.eq.s32.totalorder %s37, 0
      %p253 = por %p251, %p252
      %s255 = sadd.s32 %s254, 1
      %p258 = scmp.eq.s32.totalorder %s31, 1
      %p259 = scmp.ne.s32.totalorder %s254, %s256
      %p260 = scmp.eq.s32.totalorder %s31, 0
      %p261 = por %p259, %p260
      %p262 = scmp.ne.s32.totalorder %s254, %s256
      %p263 = scmp.eq.s32.totalorder %s36, 1
      %p264 = por %p262, %p263
      %p265 = scmp.ne.s32.totalorder %s256, %s257
      %p266 = scmp.eq.s32.totalorder %s36, 0
      %p267 = por %p265, %p266
      %p268 = scmp.ne.s32.totalorder %s256, %s257
      %p269 = scmp.eq.s32.totalorder %s37, 1
      %p270 = por %p268, %p269
      %p272 = scmp.ne.s32.totalorder %s257, %s271
      %p273 = scmp.eq.s32.totalorder %s37, 0
      %p274 = por %p272, %p273
      %s276 = sadd.s32 %s275, 1
      %p279 = scmp.eq.s32.totalorder %s31, 1
      %p280 = scmp.ne.s32.totalorder %s275, %s277
      %p281 = scmp.eq.s32.totalorder %s31, 0
      %p282 = por %p280, %p281
      %p283 = scmp.ne.s32.totalorder %s275, %s277
      %p284 = scmp.eq.s32.totalorder %s36, 1
      %p285 = por %p283, %p284
      %p286 = scmp.ne.s32.totalorder %s277, %s278
      %p287 = scmp.eq.s32.totalorder %s36, 0
      %p288 = por %p286, %p287
      %p289 = scmp.ne.s32.totalorder %s277, %s278
      %p290 = scmp.eq.s32.totalorder %s37, 1
      %p291 = por %p289, %p290
      %p293 = scmp.ne.s32.totalorder %s278, %s292
      %p294 = scmp.eq.s32.totalorder %s37, 0
      %p295 = por %p293, %p294
      %s297 = sadd.s32 %s296, 1
      %p300 = scmp.eq.s32.totalorder %s31, 1
      %p301 = scmp.ne.s32.totalorder %s296, %s298
      %p302 = scmp.eq.s32.totalorder %s31, 0
      %p303 = por %p301, %p302
      %p304 = scmp.ne.s32.totalorder %s296, %s298
      %p305 = scmp.eq.s32.totalorder %s36, 1
      %p306 = por %p304, %p305
      %p307 = scmp.ne.s32.totalorder %s298, %s299
      %p308 = scmp.eq.s32.totalorder %s36, 0
      %p309 = por %p307, %p308
      %p310 = scmp.ne.s32.totalorder %s298, %s299
      %p311 = scmp.eq.s32.totalorder %s37, 1
      %p312 = por %p310, %p311
      %p314 = scmp.ne.s32.totalorder %s299, %s313
      %p315 = scmp.eq.s32.totalorder %s37, 0
      %p316 = por %p314, %p315
      %s317 = ssub.s32 %s31, %s38
      %p318 = scmp.eq.s32.totalorder %s317, 0
      %s320 = sadd.s32 %s319, 1
      %s321 = scalar_select %p318, %s319, %s320
      %p324 = pneg %p318
      %p325 = scmp.eq.s32.totalorder %s31, 1
      %p326 = por %p324, %p325
      %p327 = scmp.ne.s32.totalorder %s319, %s322
      %p328 = scmp.eq.s32.totalorder %s31, 0
      %p329 = por %p327, %p328
      %p330 = scmp.ne.s32.totalorder %s319, %s322
      %p331 = scmp.eq.s32.totalorder %s36, 1
      %p332 = por %p330, %p331
      %p333 = scmp.ne.s32.totalorder %s322, %s323
      %p334 = scmp.eq.s32.totalorder %s36, 0
      %p335 = por %p333, %p334
      %p336 = scmp.ne.s32.totalorder %s322, %s323
      %p337 = scmp.eq.s32.totalorder %s37, 1
      %p338 = por %p336, %p337
      %p340 = scmp.ne.s32.totalorder %s323, %s339
      %p341 = scmp.eq.s32.totalorder %s37, 0
      %p342 = por %p340, %p341
      %p343 = scmp.le.s32.totalorder 1, %s31
      %p344 = scmp.lt.s32.totalorder %s31, 3
      %p345 = pnand %p343, %p344
      %p346 = pneg %p345
      // Predicated region
      $region9: #{tpu_custom_call.1} parent=5 // pred_check
        _
      $region10: #{tpu_custom_call.1} parent=5 // pred_check_branch
        %348 = sbr.rel (%p345) target = $region12
      $region11: #{tpu_custom_call.1} parent=5 // pred_region
        %s349 = ssub.s32 %s31, 1
        // Predicated region
        $region13: #{tpu_custom_call.1} parent=11 // pred_check
          %p350 = pneg %p78
        $region14: #{tpu_custom_call.1} parent=11 // pred_check_branch
          %352 = sbr.rel (%p350) target = $region16
        $region15: #{tpu_custom_call.1} parent=11 // pred_region
          %s354 = ssub.s32 16, 16
          %355 = vsyncadd [#allocation6], %s354
          %s357 = sshll.u32 [#allocation5], 4
          %s358 = int_to_ptr.vmem [resolvable:$true] %s357
          %360 = dma.hbm_to_vmem [thread:$0]  %s1, 16, %s358, [#allocation6]
        $region16: #{tpu_custom_call.1} parent=11 // pred_fallthru
          _
        // Predicated region
        $region17: #{tpu_custom_call.1} parent=11 // pred_check
          %p361 = pneg %p99
        $region18: #{tpu_custom_call.1} parent=11 // pred_check_branch
          %363 = sbr.rel (%p361) target = $region20
        $region19: #{tpu_custom_call.1} parent=11 // pred_region
          %s365 = ssub.s32 16, 16
          %366 = vsyncadd [#allocation6], %s365
          %s368 = sshll.u32 [#allocation7], 4
          %s369 = int_to_ptr.vmem [resolvable:$true] %s368
          %371 = dma.hbm_to_vmem [thread:$0]  %s2, 16, %s369, [#allocation6]
        $region20: #{tpu_custom_call.1} parent=11 // pred_fallthru
          _
        // Predicated region
        $region21: #{tpu_custom_call.1} parent=11 // pred_check
          %p372 = pneg %p120
        $region22: #{tpu_custom_call.1} parent=11 // pred_check_branch
          %374 = sbr.rel (%p372) target = $region24
        $region23: #{tpu_custom_call.1} parent=11 // pred_region
          %s376 = ssub.s32 256, 256
          %377 = vsyncadd [#allocation9], %s376
          %s378 = sshll.u32 [#allocation8], 4
          %s379 = int_to_ptr.vmem [resolvable:$true] %s378
          %384 = dma.hbm_to_vmem [thread:$0]  %s3, 256, %s379, [#allocation9], 64, 64, 4
        $region24: #{tpu_custom_call.1} parent=11 // pred_fallthru
          _
        // Predicated region
        $region25: #{tpu_custom_call.1} parent=11 // pred_check
          %p385 = pneg %p141
        $region26: #{tpu_custom_call.1} parent=11 // pred_check_branch
          %387 = sbr.rel (%p385) target = $region28
        $region27: #{tpu_custom_call.1} parent=11 // pred_region
          %s389 = ssub.s32 16, 16
          %390 = vsyncadd [#allocation9], %s389
          %s392 = sshll.u32 [#allocation10], 4
          %s393 = int_to_ptr.vmem [resolvable:$true] %s392
          %395 = dma.hbm_to_vmem [thread:$0]  %s4, 16, %s393, [#allocation9]
        $region28: #{tpu_custom_call.1} parent=11 // pred_fallthru
          _
        // Predicated region
        $region29: #{tpu_custom_call.1} parent=11 // pred_check
          %p396 = pneg %p162
        $region30: #{tpu_custom_call.1} parent=11 // pred_check_branch
          %398 = sbr.rel (%p396) target = $region32
        $region31: #{tpu_custom_call.1} parent=11 // pred_region
          %s400 = ssub.s32 256, 256
          %401 = vsyncadd [#allocation12], %s400
          %s402 = sshll.u32 [#allocation11], 4
          %s403 = int_to_ptr.vmem [resolvable:$true] %s402
          %408 = dma.hbm_to_vmem [thread:$0]  %s5, 256, %s403, [#allocation12], 64, 64, 4
        $region32: #{tpu_custom_call.1} parent=11 // pred_fallthru
          _
        // Predicated region
        $region33: #{tpu_custom_call.1} parent=11 // pred_check
          %p409 = pneg %p183
        $region34: #{tpu_custom_call.1} parent=11 // pred_check_branch
          %411 = sbr.rel (%p409) target = $region36
        $region35: #{tpu_custom_call.1} parent=11 // pred_region
          %s413 = ssub.s32 16, 16
          %414 = vsyncadd [#allocation12], %s413
          %s416 = sshll.u32 [#allocation13], 4
          %s417 = int_to_ptr.vmem [resolvable:$true] %s416
          %419 = dma.hbm_to_vmem [thread:$0]  %s6, 16, %s417, [#allocation12]
        $region36: #{tpu_custom_call.1} parent=11 // pred_fallthru
          _
        // Predicated region
        $region37: #{tpu_custom_call.1} parent=11 // pred_check
          %p420 = pneg %p204
        $region38: #{tpu_custom_call.1} parent=11 // pred_check_branch
          %422 = sbr.rel (%p420) target = $region40
        $region39: #{tpu_custom_call.1} parent=11 // pred_region
          %s424 = ssub.s32 16, 16
          %425 = vsyncadd [#allocation15], %s424
          %s427 = sshll.u32 [#allocation14], 4
          %s428 = int_to_ptr.vmem [resolvable:$true] %s427
          %430 = dma.hbm_to_vmem [thread:$0]  %s7, 16, %s428, [#allocation15]
        $region40: #{tpu_custom_call.1} parent=11 // pred_fallthru
          _
        // Predicated region
        $region41: #{tpu_custom_call.1} parent=11 // pred_check
          %p431 = pneg %p225
        $region42: #{tpu_custom_call.1} parent=11 // pred_check_branch
          %433 = sbr.rel (%p431) target = $region44
        $region43: #{tpu_custom_call.1} parent=11 // pred_region
          %s435 = ssub.s32 16, 16
          %436 = vsyncadd [#allocation15], %s435
          %s438 = sshll.u32 [#allocation16], 4
          %s439 = int_to_ptr.vmem [resolvable:$true] %s438
          %441 = dma.hbm_to_vmem [thread:$0]  %s8, 16, %s439, [#allocation15]
        $region44: #{tpu_custom_call.1} parent=11 // pred_fallthru
          _
        // Predicated region
        $region45: #{tpu_custom_call.1} parent=11 // pred_check
          %p442 = pneg %p246
        $region46: #{tpu_custom_call.1} parent=11 // pred_check_branch
          %444 = sbr.rel (%p442) target = $region48
        $region47: #{tpu_custom_call.1} parent=11 // pred_region
          %s446 = ssub.s32 256, 256
          %447 = vsyncadd [#allocation18], %s446
          %s448 = sshll.u32 [#allocation17], 4
          %s449 = int_to_ptr.vmem [resolvable:$true] %s448
          %454 = dma.hbm_to_vmem [thread:$0]  %s9, 256, %s449, [#allocation18], 64, 64, 4
        $region48: #{tpu_custom_call.1} parent=11 // pred_fallthru
          _
        // Predicated region
        $region49: #{tpu_custom_call.1} parent=11 // pred_check
          %p455 = pneg %p267
        $region50: #{tpu_custom_call.1} parent=11 // pred_check_branch
          %457 = sbr.rel (%p455) target = $region52
        $region51: #{tpu_custom_call.1} parent=11 // pred_region
          %s459 = ssub.s32 16, 16
          %460 = vsyncadd [#allocation18], %s459
          %s462 = sshll.u32 [#allocation19], 4
          %s463 = int_to_ptr.vmem [resolvable:$true] %s462
          %465 = dma.hbm_to_vmem [thread:$0]  %s10, 16, %s463, [#allocation18]
        $region52: #{tpu_custom_call.1} parent=11 // pred_fallthru
          _
        // Predicated region
        $region53: #{tpu_custom_call.1} parent=11 // pred_check
          %p466 = pneg %p288
        $region54: #{tpu_custom_call.1} parent=11 // pred_check_branch
          %468 = sbr.rel (%p466) target = $region56
        $region55: #{tpu_custom_call.1} parent=11 // pred_region
          %s470 = ssub.s32 1024, 1024
          %471 = vsyncadd [#allocation21], %s470
          %s472 = sshll.u32 [#allocation20], 4
          %s473 = int_to_ptr.vmem [resolvable:$true] %s472
          %478 = dma.hbm_to_vmem [thread:$0]  %s11, 1024, %s473, [#allocation21], 64, 64, 4
        $region56: #{tpu_custom_call.1} parent=11 // pred_fallthru
          _
        // Predicated region
        $region57: #{tpu_custom_call.1} parent=11 // pred_check
          %p479 = pneg %p309
        $region58: #{tpu_custom_call.1} parent=11 // pred_check_branch
          %481 = sbr.rel (%p479) target = $region60
        $region59: #{tpu_custom_call.1} parent=11 // pred_region
          %s483 = ssub.s32 16, 16
          %484 = vsyncadd [#allocation21], %s483
          %s486 = sshll.u32 [#allocation22], 4
          %s487 = int_to_ptr.vmem [resolvable:$true] %s486
          %489 = dma.hbm_to_vmem [thread:$0]  %s12, 16, %s487, [#allocation21]
        $region60: #{tpu_custom_call.1} parent=11 // pred_fallthru
          _
      $region12: #{tpu_custom_call.1} parent=5 // pred_fallthru
        _
      %p490 = scmp.lt.s32.totalorder %s31, 2
      // Predicated region
      $region61: #{tpu_custom_call.1} parent=5 // pred_check
        %p491 = pneg %p490
      $region62: #{tpu_custom_call.1} parent=5 // pred_check_branch
        %493 = sbr.rel (%p491) target = $region64
      $region63: #{tpu_custom_call.1} parent=5 // pred_region
        // Predicated region
        $region65: #{tpu_custom_call.1} parent=63 // pred_check
          %p494 = pneg %p51
        $region66: #{tpu_custom_call.1} parent=63 // pred_check_branch
          %496 = sbr.rel (%p494) target = $region68
        $region67: #{tpu_custom_call.1} parent=63 // pred_region
          %s497 = sand.u32 %s41, 1
          %s498 = scalar_lea.sflag [#allocation3], %s497
          %s499 = sand.u32 %s41, 1
          %s500 = smul.addr %s499, 4
          %s501 = scalar_lea.vmem [#allocation2], %s500
          %s503 = ssub.s32 64, 64
          %504 = vsyncadd %s498, %s503
          %s505 = smul.addr %s31, 64
          %s506 = scalar_lea.hbm %s0, %s505
          %s508 = sshll.u32 %s501, 4
          %s509 = int_to_ptr.vmem [resolvable:$true] %s508
          %511 = dma.hbm_to_vmem [thread:$0]  %s506, 64, %s509, %s498
        $region68: #{tpu_custom_call.1} parent=63 // pred_fallthru
          _
      $region64: #{tpu_custom_call.1} parent=5 // pred_fallthru
        _
      %p512 = scmp.le.s32.totalorder 1, %s31
      %p513 = scmp.lt.s32.totalorder %s31, 3
      %p514 = pnand %p512, %p513
      %p515 = pneg %p514
      // Predicated region
      $region69: #{tpu_custom_call.1} parent=5 // pred_check
        _
      $region70: #{tpu_custom_call.1} parent=5 // pred_check_branch
        %517 = sbr.rel (%p514) target = $region72
      $region71: #{tpu_custom_call.1} parent=5 // pred_region
        %s518 = ssub.s32 %s31, 1
        %s519 = sand.u32 %s44, 1
        %s520 = scalar_lea.sflag [#allocation3], %s519
        %s521 = sand.u32 %s44, 1
        %s522 = smul.addr %s521, 4
        %s523 = scalar_lea.vmem [#allocation2], %s522
        // Predicated region
        $region73: #{tpu_custom_call.1} parent=71 // pred_check
          %p524 = pneg %p57
        $region74: #{tpu_custom_call.1} parent=71 // pred_check_branch
          %526 = sbr.rel (%p524) target = $region76
        $region75: #{tpu_custom_call.1} parent=71 // pred_region
          %527 = dma.done %s520, 64
        $region76: #{tpu_custom_call.1} parent=71 // pred_fallthru
          _
        // Predicated region
        $region77: #{tpu_custom_call.1} parent=71 // pred_check
          %p528 = pneg %p78
        $region78: #{tpu_custom_call.1} parent=71 // pred_check_branch
          %530 = sbr.rel (%p528) target = $region80
        $region79: #{tpu_custom_call.1} parent=71 // pred_region
          %531 = dma.done [#allocation6], 16
        $region80: #{tpu_custom_call.1} parent=71 // pred_fallthru
          _
        // Predicated region
        $region81: #{tpu_custom_call.1} parent=71 // pred_check
          %p532 = pneg %p99
        $region82: #{tpu_custom_call.1} parent=71 // pred_check_branch
          %534 = sbr.rel (%p532) target = $region84
        $region83: #{tpu_custom_call.1} parent=71 // pred_region
          %535 = dma.done [#allocation6], 16
        $region84: #{tpu_custom_call.1} parent=71 // pred_fallthru
          _
        // Predicated region
        $region85: #{tpu_custom_call.1} parent=71 // pred_check
          %p536 = pneg %p120
        $region86: #{tpu_custom_call.1} parent=71 // pred_check_branch
          %538 = sbr.rel (%p536) target = $region88
        $region87: #{tpu_custom_call.1} parent=71 // pred_region
          %539 = dma.done [#allocation9], 256
        $region88: #{tpu_custom_call.1} parent=71 // pred_fallthru
          _
        // Predicated region
        $region89: #{tpu_custom_call.1} parent=71 // pred_check
          %p540 = pneg %p141
        $region90: #{tpu_custom_call.1} parent=71 // pred_check_branch
          %542 = sbr.rel (%p540) target = $region92
        $region91: #{tpu_custom_call.1} parent=71 // pred_region
          %543 = dma.done [#allocation9], 16
        $region92: #{tpu_custom_call.1} parent=71 // pred_fallthru
          _
        // Predicated region
        $region93: #{tpu_custom_call.1} parent=71 // pred_check
          %p544 = pneg %p162
        $region94: #{tpu_custom_call.1} parent=71 // pred_check_branch
          %546 = sbr.rel (%p544) target = $region96
        $region95: #{tpu_custom_call.1} parent=71 // pred_region
          %547 = dma.done [#allocation12], 256
        $region96: #{tpu_custom_call.1} parent=71 // pred_fallthru
          _
        // Predicated region
        $region97: #{tpu_custom_call.1} parent=71 // pred_check
          %p548 = pneg %p183
        $region98: #{tpu_custom_call.1} parent=71 // pred_check_branch
          %550 = sbr.rel (%p548) target = $region100
        $region99: #{tpu_custom_call.1} parent=71 // pred_region
          %551 = dma.done [#allocation12], 16
        $region100: #{tpu_custom_call.1} parent=71 // pred_fallthru
          _
        // Predicated region
        $region101: #{tpu_custom_call.1} parent=71 // pred_check
          %p552 = pneg %p204
        $region102: #{tpu_custom_call.1} parent=71 // pred_check_branch
          %554 = sbr.rel (%p552) target = $region104
        $region103: #{tpu_custom_call.1} parent=71 // pred_region
          %555 = dma.done [#allocation15], 16
        $region104: #{tpu_custom_call.1} parent=71 // pred_fallthru
          _
        // Predicated region
        $region105: #{tpu_custom_call.1} parent=71 // pred_check
          %p556 = pneg %p225
        $region106: #{tpu_custom_call.1} parent=71 // pred_check_branch
          %558 = sbr.rel (%p556) target = $region108
        $region107: #{tpu_custom_call.1} parent=71 // pred_region
          %559 = dma.done [#allocation15], 16
        $region108: #{tpu_custom_call.1} parent=71 // pred_fallthru
          _
        // Predicated region
        $region109: #{tpu_custom_call.1} parent=71 // pred_check
          %p560 = pneg %p246
        $region110: #{tpu_custom_call.1} parent=71 // pred_check_branch
          %562 = sbr.rel (%p560) target = $region112
        $region111: #{tpu_custom_call.1} parent=71 // pred_region
          %563 = dma.done [#allocation18], 256
        $region112: #{tpu_custom_call.1} parent=71 // pred_fallthru
          _
        // Predicated region
        $region113: #{tpu_custom_call.1} parent=71 // pred_check
          %p564 = pneg %p267
        $region114: #{tpu_custom_call.1} parent=71 // pred_check_branch
          %566 = sbr.rel (%p564) target = $region116
        $region115: #{tpu_custom_call.1} parent=71 // pred_region
          %567 = dma.done [#allocation18], 16
        $region116: #{tpu_custom_call.1} parent=71 // pred_fallthru
          _
        // Predicated region
        $region117: #{tpu_custom_call.1} parent=71 // pred_check
          %p568 = pneg %p288
        $region118: #{tpu_custom_call.1} parent=71 // pred_check_branch
          %570 = sbr.rel (%p568) target = $region120
        $region119: #{tpu_custom_call.1} parent=71 // pred_region
          %571 = dma.done [#allocation21], 1024
        $region120: #{tpu_custom_call.1} parent=71 // pred_fallthru
          _
        // Predicated region
        $region121: #{tpu_custom_call.1} parent=71 // pred_check
          %p572 = pneg %p309
        $region122: #{tpu_custom_call.1} parent=71 // pred_check_branch
          %574 = sbr.rel (%p572) target = $region124
        $region123: #{tpu_custom_call.1} parent=71 // pred_region
          %575 = dma.done [#allocation21], 16
        $region124: #{tpu_custom_call.1} parent=71 // pred_fallthru
          _
        %s576 = sand.u32 %s44, 1
        %s577 = scalar_lea.sflag [#allocation3], %s576
        %s578 = sand.u32 %s44, 1
        %s579 = smul.addr %s578, 4
        %s580 = scalar_lea.vmem [#allocation2], %s579
        %p581 = pneg %p57
        %p582 = pneg %p54
        %p583 = pneg %p78
        %p584 = pneg %p75
        %p585 = pneg %p99
        %p586 = pneg %p96
        %p587 = pneg %p120
        %p588 = pneg %p117
        %p589 = pneg %p141
        %p590 = pneg %p138
        %p591 = pneg %p162
        %p592 = pneg %p159
        %p593 = pneg %p183
        %p594 = pneg %p180
        %p595 = pneg %p204
        %p596 = pneg %p201
        %p597 = pneg %p225
        %p598 = pneg %p222
        %p599 = pneg %p246
        %p600 = pneg %p243
        %p601 = pneg %p267
        %p602 = pneg %p264
        %p603 = pneg %p288
        %p604 = pneg %p285
        %p605 = pneg %p309
        %p606 = pneg %p306
        %p607 = pneg %p335
        %p608 = pneg %p332
        %s609 = sand.u32 %s322, 1
        %s610 = scalar_lea.sflag [#allocation4], %s609
        %s611 = sand.u32 %s322, 1
        %s612 = smul.addr %s611, 4
        %s613 = scalar_lea.vmem [#allocation23], %s612
        %v615 = vld [vmem:[%s523] sm:$0xf]
        %v616 = vunpack.c.l.bf16 %v615
        %v617 = vld [vmem:[#allocation5] sm:$0x1]
        %v618 = vld [vmem:[#allocation7] sm:$0x1]
        %vm619 = vcmask 261120
        %v620 = vsel %vm619, %v616, 0.0
        %621 = vadd.xlane.f32.xlu0 %v620
        %v622 = vpop.xlane.xlu0 %621
        %v623 = vrcp.pop 32.0
        %v624 = vmul.f32 %v622, %v623
        %v625 = vsub.f32 %v616, %v624
        %v626 = vmul.f32 %v625, %v625
        %v627 = vsel %vm619, %v626, 0.0
        %628 = vadd.xlane.f32.xlu0 %v627
        %v629 = vpop.xlane.xlu0 %628
        %v630 = vmul.f32 %v629, %v623
        %v631 = vadd.f32 %v630, 1e-05
        %v632 = vrsqrt.pop %v631
        %v633 = vmul.f32 %v625, %v632
        %v635 = vlaneseq
        %v636 = vshrl.u32 %v635, 7
        %v637 = vsub.s32 0, %v636
        %v638 = vrot.slane %v617, %v637
        %v640 = vmul.f32 %v633, %v638
        %v642 = vlaneseq
        %v643 = vshrl.u32 %v642, 7
        %v644 = vsub.s32 0, %v643
        %v645 = vrot.slane %v618, %v644
        %v647 = vadd.f32 %v640, %v645
        %v648 = vpack.c.bf16 %v647, %v647
        %v649 = vld [vmem:[#allocation8] sm:$0xf]
        %v650 = vld [vmem:[#allocation8 + $0x4] sm:$0xf]
        %v651 = vld [vmem:[#allocation8 + $0x8] sm:$0xf]
        %v652 = vld [vmem:[#allocation8 + $0xc] sm:$0xf]
        %v653 = vld [vmem:[#allocation10] sm:$0x1]
        %v655 = vlaneseq
        %v656 = vshrl.u32 %v655, 7
        %v657 = vsub.s32 0, %v656
        %v658 = vrot.slane %v653, %v657
        %v664 = vunpack.c.l.b16 %v649
        %v665 = vunpack.c.l.b16 %v650
        %v666 = vunpack.c.l.b16 %v651
        %v667 = vunpack.c.l.b16 %v652
        %v668 = vpack.c.b16 %v665, %v664
        %v669 = vpack.c.b16 %v667, %v666
        %v673 = vsel %vm619, %v648, 0
        %675 = vmatprep.subr.bf16.mxu0 0
        %676 = vmatpush1.bf16.msra.mxu0 %v668
        %677 = vmatprep.subr.bf16.mxu0 0
        %678 = vmatpush1.bf16.msra.mxu0 %v669
        %679 = vmatprep.subr.bf16.mxu0 0
        %680 = vmatpush1.bf16.msra.mxu0 0
        %681 = vmatprep.subr.bf16.mxu0 0
        %682 = vmatpush1.bf16.msra.mxu0 0
        %683 = vmatprep.subr.bf16.mxu0 0
        %684 = vmatpush1.bf16.msra.mxu0 0
        %685 = vmatprep.subr.bf16.mxu0 0
        %686 = vmatpush1.bf16.msra.mxu0 0
        %687 = vmatprep.subr.bf16.mxu0 0
        %688 = vmatpush1.bf16.msra.mxu0 0
        %689 = vmatprep.subr.bf16.mxu0 0
        %690 = vmatpush1.bf16.msra.mxu0 0
        %691 = vmatprep.subr.bf16.mxu0 0
        %692 = vmatpush1.bf16.msra.mxu0 0
        %693 = vmatprep.subr.bf16.mxu0 0
        %694 = vmatpush1.bf16.msra.mxu0 0
        %695 = vmatprep.subr.bf16.mxu0 0
        %696 = vmatpush1.bf16.msra.mxu0 0
        %697 = vmatprep.subr.bf16.mxu0 0
        %698 = vmatpush1.bf16.msra.mxu0 0
        %699 = vmatprep.subr.bf16.mxu0 0
        %700 = vmatpush1.bf16.msra.mxu0 0
        %701 = vmatprep.subr.bf16.mxu0 0
        %702 = vmatpush1.bf16.msra.mxu0 0
        %703 = vmatprep.subr.bf16.mxu0 0
        %704 = vmatpush1.bf16.msra.mxu0 0
        %705 = vmatprep.subr.bf16.mxu0 0
        %706 = vmatpush1.bf16.msra.mxu0 0
        %707 = vmatprep.mubr.bf16.mxu0 0
        %708 = vmatmul.mubr.bf16.gmra.mrb[0].mxu0 %v673
        %v709 = vpop.f32.mrb[0].mxu0
        %v710 = vadd.f32 %v658, %v709
        %v711 = vpop.f32.mrb[0].mxu0
        %v712 = vpop.f32.mrb[0].mxu0
        %v713 = vpop.f32.mrb[0].mxu0
        %714 = vdwg.mxu0
        %716 = vrot.lane.b32.xlu0 %v710, 120
        %v717 = vpop.permute.xlu0 %716
        %719 = vrot.lane.b32.xlu0 %v710, 112
        %v720 = vpop.permute.xlu0 %719
        %722 = vrot.lane.b32.xlu0 %v710, 104
        %v723 = vpop.permute.xlu0 %722
        %v725 = vpack.c.bf16 %v710, %v710
        %v726 = vpack.c.bf16 %v717, %v717
        %v727 = vpack.c.bf16 %v720, %v720
        %v728 = vpack.c.bf16 %v723, %v723
        %730 = vrot.lane.b32.xlu0 %v725, 96
        %v731 = vpop.permute.xlu0 %730
        %vm732 = vcmask 64512
        %v734 = vsel %vm732, %v725, 0
        %v737 = vsel %vm732, %v731, 0
        %739 = vmatprep.subr.bf16.mxu0 0
        %740 = vmatpush1.bf16.xpose.msra.mxu0 %v737
        %741 = vmatprep.subr.bf16.mxu0 0
        %742 = vmatpush1.bf16.xpose.msra.mxu0 0
        %743 = vmatprep.subr.bf16.mxu0 0
        %744 = vmatpush1.bf16.xpose.msra.mxu0 0
        %745 = vmatprep.subr.bf16.mxu0 0
        %746 = vmatpush1.bf16.xpose.msra.mxu0 0
        %747 = vmatprep.subr.bf16.mxu0 0
        %748 = vmatpush1.bf16.xpose.msra.mxu0 0
        %749 = vmatprep.subr.bf16.mxu0 0
        %750 = vmatpush1.bf16.xpose.msra.mxu0 0
        %751 = vmatprep.subr.bf16.mxu0 0
        %752 = vmatpush1.bf16.xpose.msra.mxu0 0
        %753 = vmatprep.subr.bf16.mxu0 0
        %754 = vmatpush1.bf16.xpose.msra.mxu0 0
        %755 = vmatprep.subr.bf16.mxu0 0
        %756 = vmatpush1.bf16.xpose.msra.mxu0 0
        %757 = vmatprep.subr.bf16.mxu0 0
        %758 = vmatpush1.bf16.xpose.msra.mxu0 0
        %759 = vmatprep.subr.bf16.mxu0 0
        %760 = vmatpush1.bf16.xpose.msra.mxu0 0
        %761 = vmatprep.subr.bf16.mxu0 0
        %762 = vmatpush1.bf16.xpose.msra.mxu0 0
        %763 = vmatprep.subr.bf16.mxu0 0
        %764 = vmatpush1.bf16.xpose.msra.mxu0 0
        %765 = vmatprep.subr.bf16.mxu0 0
        %766 = vmatpush1.bf16.xpose.msra.mxu0 0
        %767 = vmatprep.subr.bf16.mxu0 0
        %768 = vmatpush1.bf16.xpose.msra.mxu0 0
        %769 = vmatprep.subr.bf16.mxu0 0
        %770 = vmatpush1.bf16.xpose.msra.mxu0 0
        %771 = vmatprep.mubr.bf16.mxu0 0
        %772 = vmatmul.mubr.bf16.gmra.mrb[0].mxu0 %v734
        %v773 = vpop.f32.mrb[0].mxu0
        %v774 = vadd.f32 0.0, %v773
        %v775 = vpop.f32.mrb[0].mxu0
        %v776 = vpop.f32.mrb[0].mxu0
        %v777 = vpop.f32.mrb[0].mxu0
        %778 = vdwg.mxu0
        %780 = vrot.lane.b32.xlu0 %v726, 96
        %v781 = vpop.permute.xlu0 %780
        %v783 = vsel %vm732, %v726, 0
        %v786 = vsel %vm732, %v781, 0
        %788 = vmatprep.subr.bf16.mxu0 0
        %789 = vmatpush1.bf16.xpose.msra.mxu0 %v786
        %790 = vmatprep.subr.bf16.mxu0 0
        %791 = vmatpush1.bf16.xpose.msra.mxu0 0
        %792 = vmatprep.subr.bf16.mxu0 0
        %793 = vmatpush1.bf16.xpose.msra.mxu0 0
        %794 = vmatprep.subr.bf16.mxu0 0
        %795 = vmatpush1.bf16.xpose.msra.mxu0 0
        %796 = vmatprep.subr.bf16.mxu0 0
        %797 = vmatpush1.bf16.xpose.msra.mxu0 0
        %798 = vmatprep.subr.bf16.mxu0 0
        %799 = vmatpush1.bf16.xpose.msra.mxu0 0
        %800 = vmatprep.subr.bf16.mxu0 0
        %801 = vmatpush1.bf16.xpose.msra.mxu0 0
        %802 = vmatprep.subr.bf16.mxu0 0
        %803 = vmatpush1.bf16.xpose.msra.mxu0 0
        %804 = vmatprep.subr.bf16.mxu0 0
        %805 = vmatpush1.bf16.xpose.msra.mxu0 0
        %806 = vmatprep.subr.bf16.mxu0 0
        %807 = vmatpush1.bf16.xpose.msra.mxu0 0
        %808 = vmatprep.subr.bf16.mxu0 0
        %809 = vmatpush1.bf16.xpose.msra.mxu0 0
        %810 = vmatprep.subr.bf16.mxu0 0
        %811 = vmatpush1.bf16.xpose.msra.mxu0 0
        %812 = vmatprep.subr.bf16.mxu0 0
        %813 = vmatpush1.bf16.xpose.msra.mxu0 0
        %814 = vmatprep.subr.bf16.mxu0 0
        %815 = vmatpush1.bf16.xpose.msra.mxu0 0
        %816 = vmatprep.subr.bf16.mxu0 0
        %817 = vmatpush1.bf16.xpose.msra.mxu0 0
        %818 = vmatprep.subr.bf16.mxu0 0
        %819 = vmatpush1.bf16.xpose.msra.mxu0 0
        %820 = vmatprep.mubr.bf16.mxu0 0
        %821 = vmatmul.mubr.bf16.gmra.mrb[0].mxu0 %v783
        %v822 = vpop.f32.mrb[0].mxu0
        %v823 = vadd.f32 0.0, %v822
        %v824 = vpop.f32.mrb[0].mxu0
        %v825 = vpop.f32.mrb[0].mxu0
        %v826 = vpop.f32.mrb[0].mxu0
        %827 = vdwg.mxu0
        %829 = vrot.lane.b32.xlu0 %v727, 96
        %v830 = vpop.permute.xlu0 %829
        %v832 = vsel %vm732, %v727, 0
        %v835 = vsel %vm732, %v830, 0
        %837 = vmatprep.subr.bf16.mxu0 0
        %838 = vmatpush1.bf16.xpose.msra.mxu0 %v835
        %839 = vmatprep.subr.bf16.mxu0 0
        %840 = vmatpush1.bf16.xpose.msra.mxu0 0
        %841 = vmatprep.subr.bf16.mxu0 0
        %842 = vmatpush1.bf16.xpose.msra.mxu0 0
        %843 = vmatprep.subr.bf16.mxu0 0
        %844 = vmatpush1.bf16.xpose.msra.mxu0 0
        %845 = vmatprep.subr.bf16.mxu0 0
        %846 = vmatpush1.bf16.xpose.msra.mxu0 0
        %847 = vmatprep.subr.bf16.mxu0 0
        %848 = vmatpush1.bf16.xpose.msra.mxu0 0
        %849 = vmatprep.subr.bf16.mxu0 0
        %850 = vmatpush1.bf16.xpose.msra.mxu0 0
        %851 = vmatprep.subr.bf16.mxu0 0
        %852 = vmatpush1.bf16.xpose.msra.mxu0 0
        %853 = vmatprep.subr.bf16.mxu0 0
        %854 = vmatpush1.bf16.xpose.msra.mxu0 0
        %855 = vmatprep.subr.bf16.mxu0 0
        %856 = vmatpush1.bf16.xpose.msra.mxu0 0
        %857 = vmatprep.subr.bf16.mxu0 0
        %858 = vmatpush1.bf16.xpose.msra.mxu0 0
        %859 = vmatprep.subr.bf16.mxu0 0
        %860 = vmatpush1.bf16.xpose.msra.mxu0 0
        %861 = vmatprep.subr.bf16.mxu0 0
        %862 = vmatpush1.bf16.xpose.msra.mxu0 0
        %863 = vmatprep.subr.bf16.mxu0 0
        %864 = vmatpush1.bf16.xpose.msra.mxu0 0
        %865 = vmatprep.subr.bf16.mxu0 0
        %866 = vmatpush1.bf16.xpose.msra.mxu0 0
        %867 = vmatprep.subr.bf16.mxu0 0
        %868 = vmatpush1.bf16.xpose.msra.mxu0 0
        %869 = vmatprep.mubr.bf16.mxu0 0
        %870 = vmatmul.mubr.bf16.gmra.mrb[0].mxu0 %v832
        %v871 = vpop.f32.mrb[0].mxu0
        %v872 = vadd.f32 0.0, %v871
        %v873 = vpop.f32.mrb[0].mxu0
        %v874 = vpop.f32.mrb[0].mxu0
        %v875 = vpop.f32.mrb[0].mxu0
        %876 = vdwg.mxu0
        %878 = vrot.lane.b32.xlu0 %v728, 96
        %v879 = vpop.permute.xlu0 %878
        %v881 = vsel %vm732, %v728, 0
        %v884 = vsel %vm732, %v879, 0
        %886 = vmatprep.subr.bf16.mxu0 0
        %887 = vmatpush1.bf16.xpose.msra.mxu0 %v884
        %888 = vmatprep.subr.bf16.mxu0 0
        %889 = vmatpush1.bf16.xpose.msra.mxu0 0
        %890 = vmatprep.subr.bf16.mxu0 0
        %891 = vmatpush1.bf16.xpose.msra.mxu0 0
        %892 = vmatprep.subr.bf16.mxu0 0
        %893 = vmatpush1.bf16.xpose.msra.mxu0 0
        %894 = vmatprep.subr.bf16.mxu0 0
        %895 = vmatpush1.bf16.xpose.msra.mxu0 0
        %896 = vmatprep.subr.bf16.mxu0 0
        %897 = vmatpush1.bf16.xpose.msra.mxu0 0
        %898 = vmatprep.subr.bf16.mxu0 0
        %899 = vmatpush1.bf16.xpose.msra.mxu0 0
        %900 = vmatprep.subr.bf16.mxu0 0
        %901 = vmatpush1.bf16.xpose.msra.mxu0 0
        %902 = vmatprep.subr.bf16.mxu0 0
        %903 = vmatpush1.bf16.xpose.msra.mxu0 0
        %904 = vmatprep.subr.bf16.mxu0 0
        %905 = vmatpush1.bf16.xpose.msra.mxu0 0
        %906 = vmatprep.subr.bf16.mxu0 0
        %907 = vmatpush1.bf16.xpose.msra.mxu0 0
        %908 = vmatprep.subr.bf16.mxu0 0
        %909 = vmatpush1.bf16.xpose.msra.mxu0 0
        %910 = vmatprep.subr.bf16.mxu0 0
        %911 = vmatpush1.bf16.xpose.msra.mxu0 0
        %912 = vmatprep.subr.bf16.mxu0 0
        %913 = vmatpush1.bf16.xpose.msra.mxu0 0
        %914 = vmatprep.subr.bf16.mxu0 0
        %915 = vmatpush1.bf16.xpose.msra.mxu0 0
        %916 = vmatprep.subr.bf16.mxu0 0
        %917 = vmatpush1.bf16.xpose.msra.mxu0 0
        %918 = vmatprep.mubr.bf16.mxu0 0
        %919 = vmatmul.mubr.bf16.gmra.mrb[0].mxu0 %v881
        %v920 = vpop.f32.mrb[0].mxu0
        %v921 = vadd.f32 0.0, %v920
        %v922 = vpop.f32.mrb[0].mxu0
        %v923 = vpop.f32.mrb[0].mxu0
        %v924 = vpop.f32.mrb[0].mxu0
        %925 = vdwg.mxu0
        %v926 = vmul.f32 %v774, 0.35355338
        %v927 = vmul.f32 %v823, 0.35355338
        %v928 = vmul.f32 %v872, 0.35355338
        %v929 = vmul.f32 %v921, 0.35355338
        %v930 = vlaneseq
        %v931 = vshrl.u32 %v930, 7
        %v932 = vlaneseq
        %v933 = vand.u32 %v932, 127
        %vm934 = vcmp.ge.s32.totalorder %v931, %v933
        %v935 = vsel %vm934, %v926, -inf
        %v936 = vsel %vm934, %v927, -inf
        %v937 = vsel %vm934, %v928, -inf
        %v938 = vsel %vm934, %v929, -inf
        %v939 = vsel %vm732, %v935, -inf
        %940 = vmax.xlane.f32.xlu0 %v939
        %v941 = vpop.xlane.xlu0 %940
        %v942 = vsel %vm732, %v936, -inf
        %943 = vmax.xlane.f32.xlu0 %v942
        %v944 = vpop.xlane.xlu0 %943
        %v945 = vsel %vm732, %v937, -inf
        %946 = vmax.xlane.f32.xlu0 %v945
        %v947 = vpop.xlane.xlu0 %946
        %v948 = vsel %vm732, %v938, -inf
        %949 = vmax.xlane.f32.xlu0 %v948
        %v950 = vpop.xlane.xlu0 %949
        %v951 = vsub.f32 %v935, %v941
        %v952 = vsub.f32 %v936, %v944
        %v953 = vsub.f32 %v937, %v947
        %v954 = vsub.f32 %v938, %v950
        %v955 = vmul.f32 %v951, 1.442695
        %v956 = vpow.pop %v955
        %v957 = vmul.f32 %v952, 1.442695
        %v958 = vpow.pop %v957
        %v959 = vmul.f32 %v953, 1.442695
        %v960 = vpow.pop %v959
        %v961 = vmul.f32 %v954, 1.442695
        %v962 = vpow.pop %v961
        %v963 = vsel %vm732, %v956, 0.0
        %964 = vadd.xlane.f32.xlu0 %v963
        %v965 = vpop.xlane.xlu0 %964
        %v966 = vsel %vm732, %v958, 0.0
        %967 = vadd.xlane.f32.xlu0 %v966
        %v968 = vpop.xlane.xlu0 %967
        %v969 = vsel %vm732, %v960, 0.0
        %970 = vadd.xlane.f32.xlu0 %v969
        %v971 = vpop.xlane.xlu0 %970
        %v972 = vsel %vm732, %v962, 0.0
        %973 = vadd.xlane.f32.xlu0 %v972
        %v974 = vpop.xlane.xlu0 %973
        %v975 = vrcp.pop %v965
        %v976 = vrcp.pop %v968
        %v977 = vrcp.pop %v971
        %v978 = vrcp.pop %v974
        %v979 = vmul.f32 %v956, %v975
        %v980 = vmul.f32 %v958, %v976
        %v981 = vmul.f32 %v960, %v977
        %v982 = vmul.f32 %v962, %v978
        %v983 = vpack.c.bf16 %v979, %v979
        %v984 = vpack.c.bf16 %v980, %v980
        %v985 = vpack.c.bf16 %v981, %v981
        %v986 = vpack.c.bf16 %v982, %v982
        %987 = vrot.lane.b32.xlu0 %v725, 64
        %v988 = vpop.permute.xlu0 %987
        %v990 = vsel %vm732, %v983, 0
        %vm992 = vcmask 1043456
        %v994 = vsel %vm992, %v988, 0
        %996 = vmatprep.subr.bf16.mxu0 0
        %997 = vmatpush1.bf16.msra.mxu0 %v994
        %998 = vmatprep.subr.bf16.mxu0 0
        %999 = vmatpush1.bf16.msra.mxu0 0
        %1000 = vmatprep.subr.bf16.mxu0 0
        %1001 = vmatpush1.bf16.msra.mxu0 0
        %1002 = vmatprep.subr.bf16.mxu0 0
        %1003 = vmatpush1.bf16.msra.mxu0 0
        %1004 = vmatprep.subr.bf16.mxu0 0
        %1005 = vmatpush1.bf16.msra.mxu0 0
        %1006 = vmatprep.subr.bf16.mxu0 0
        %1007 = vmatpush1.bf16.msra.mxu0 0
        %1008 = vmatprep.subr.bf16.mxu0 0
        %1009 = vmatpush1.bf16.msra.mxu0 0
        %1010 = vmatprep.subr.bf16.mxu0 0
        %1011 = vmatpush1.bf16.msra.mxu0 0
        %1012 = vmatprep.subr.bf16.mxu0 0
        %1013 = vmatpush1.bf16.msra.mxu0 0
        %1014 = vmatprep.subr.bf16.mxu0 0
        %1015 = vmatpush1.bf16.msra.mxu0 0
        %1016 = vmatprep.subr.bf16.mxu0 0
        %1017 = vmatpush1.bf16.msra.mxu0 0
        %1018 = vmatprep.subr.bf16.mxu0 0
        %1019 = vmatpush1.bf16.msra.mxu0 0
        %1020 = vmatprep.subr.bf16.mxu0 0
        %1021 = vmatpush1.bf16.msra.mxu0 0
        %1022 = vmatprep.subr.bf16.mxu0 0
        %1023 = vmatpush1.bf16.msra.mxu0 0
        %1024 = vmatprep.subr.bf16.mxu0 0
        %1025 = vmatpush1.bf16.msra.mxu0 0
        %1026 = vmatprep.subr.bf16.mxu0 0
        %1027 = vmatpush1.bf16.msra.mxu0 0
        %1028 = vmatprep.mubr.bf16.mxu0 0
        %1029 = vmatmul.mubr.bf16.gmra.mrb[0].mxu0 %v990
        %v1030 = vpop.f32.mrb[0].mxu0
        %v1031 = vadd.f32 0.0, %v1030
        %v1032 = vpop.f32.mrb[0].mxu0
        %v1033 = vpop.f32.mrb[0].mxu0
        %v1034 = vpop.f32.mrb[0].mxu0
        %1035 = vdwg.mxu0
        %1036 = vrot.lane.b32.xlu0 %v726, 64
        %v1037 = vpop.permute.xlu0 %1036
        %v1039 = vsel %vm732, %v984, 0
        %v1042 = vsel %vm992, %v1037, 0
        %1044 = vmatprep.subr.bf16.mxu0 0
        %1045 = vmatpush1.bf16.msra.mxu0 %v1042
        %1046 = vmatprep.subr.bf16.mxu0 0
        %1047 = vmatpush1.bf16.msra.mxu0 0
        %1048 = vmatprep.subr.bf16.mxu0 0
        %1049 = vmatpush1.bf16.msra.mxu0 0
        %1050 = vmatprep.subr.bf16.mxu0 0
        %1051 = vmatpush1.bf16.msra.mxu0 0
        %1052 = vmatprep.subr.bf16.mxu0 0
        %1053 = vmatpush1.bf16.msra.mxu0 0
        %1054 = vmatprep.subr.bf16.mxu0 0
        %1055 = vmatpush1.bf16.msra.mxu0 0
        %1056 = vmatprep.subr.bf16.mxu0 0
        %1057 = vmatpush1.bf16.msra.mxu0 0
        %1058 = vmatprep.subr.bf16.mxu0 0
        %1059 = vmatpush1.bf16.msra.mxu0 0
        %1060 = vmatprep.subr.bf16.mxu0 0
        %1061 = vmatpush1.bf16.msra.mxu0 0
        %1062 = vmatprep.subr.bf16.mxu0 0
        %1063 = vmatpush1.bf16.msra.mxu0 0
        %1064 = vmatprep.subr.bf16.mxu0 0
        %1065 = vmatpush1.bf16.msra.mxu0 0
        %1066 = vmatprep.subr.bf16.mxu0 0
        %1067 = vmatpush1.bf16.msra.mxu0 0
        %1068 = vmatprep.subr.bf16.mxu0 0
        %1069 = vmatpush1.bf16.msra.mxu0 0
        %1070 = vmatprep.subr.bf16.mxu0 0
        %1071 = vmatpush1.bf16.msra.mxu0 0
        %1072 = vmatprep.subr.bf16.mxu0 0
        %1073 = vmatpush1.bf16.msra.mxu0 0
        %1074 = vmatprep.subr.bf16.mxu0 0
        %1075 = vmatpush1.bf16.msra.mxu0 0
        %1076 = vmatprep.mubr.bf16.mxu0 0
        %1077 = vmatmul.mubr.bf16.gmra.mrb[0].mxu0 %v1039
        %v1078 = vpop.f32.mrb[0].mxu0
        %v1079 = vadd.f32 0.0, %v1078
        %v1080 = vpop.f32.mrb[0].mxu0
        %v1081 = vpop.f32.mrb[0].mxu0
        %v1082 = vpop.f32.mrb[0].mxu0
        %1083 = vdwg.mxu0
        %1084 = vrot.lane.b32.xlu0 %v727, 64
        %v1085 = vpop.permute.xlu0 %1084
        %v1087 = vsel %vm732, %v985, 0
        %v1090 = vsel %vm992, %v1085, 0
        %1092 = vmatprep.subr.bf16.mxu0 0
        %1093 = vmatpush1.bf16.msra.mxu0 %v1090
        %1094 = vmatprep.subr.bf16.mxu0 0
        %1095 = vmatpush1.bf16.msra.mxu0 0
        %1096 = vmatprep.subr.bf16.mxu0 0
        %1097 = vmatpush1.bf16.msra.mxu0 0
        %1098 = vmatprep.subr.bf16.mxu0 0
        %1099 = vmatpush1.bf16.msra.mxu0 0
        %1100 = vmatprep.subr.bf16.mxu0 0
        %1101 = vmatpush1.bf16.msra.mxu0 0
        %1102 = vmatprep.subr.bf16.mxu0 0
        %1103 = vmatpush1.bf16.msra.mxu0 0
        %1104 = vmatprep.subr.bf16.mxu0 0
        %1105 = vmatpush1.bf16.msra.mxu0 0
        %1106 = vmatprep.subr.bf16.mxu0 0
        %1107 = vmatpush1.bf16.msra.mxu0 0
        %1108 = vmatprep.subr.bf16.mxu0 0
        %1109 = vmatpush1.bf16.msra.mxu0 0
        %1110 = vmatprep.subr.bf16.mxu0 0
        %1111 = vmatpush1.bf16.msra.mxu0 0
        %1112 = vmatprep.subr.bf16.mxu0 0
        %1113 = vmatpush1.bf16.msra.mxu0 0
        %1114 = vmatprep.subr.bf16.mxu0 0
        %1115 = vmatpush1.bf16.msra.mxu0 0
        %1116 = vmatprep.subr.bf16.mxu0 0
        %1117 = vmatpush1.bf16.msra.mxu0 0
        %1118 = vmatprep.subr.bf16.mxu0 0
        %1119 = vmatpush1.bf16.msra.mxu0 0
        %1120 = vmatprep.subr.bf16.mxu0 0
        %1121 = vmatpush1.bf16.msra.mxu0 0
        %1122 = vmatprep.subr.bf16.mxu0 0
        %1123 = vmatpush1.bf16.msra.mxu0 0
        %1124 = vmatprep.mubr.bf16.mxu0 0
        %1125 = vmatmul.mubr.bf16.gmra.mrb[0].mxu0 %v1087
        %v1126 = vpop.f32.mrb[0].mxu0
        %v1127 = vadd.f32 0.0, %v1126
        %v1128 = vpop.f32.mrb[0].mxu0
        %v1129 = vpop.f32.mrb[0].mxu0
        %v1130 = vpop.f32.mrb[0].mxu0
        %1131 = vdwg.mxu0
        %1132 = vrot.lane.b32.xlu0 %v728, 64
        %v1133 = vpop.permute.xlu0 %1132
        %v1135 = vsel %vm732, %v986, 0
        %v1138 = vsel %vm992, %v1133, 0
        %1140 = vmatprep.subr.bf16.mxu0 0
        %1141 = vmatpush1.bf16.msra.mxu0 %v1138
        %1142 = vmatprep.subr.bf16.mxu0 0
        %1143 = vmatpush1.bf16.msra.mxu0 0
        %1144 = vmatprep.subr.bf16.mxu0 0
        %1145 = vmatpush1.bf16.msra.mxu0 0
        %1146 = vmatprep.subr.bf16.mxu0 0
        %1147 = vmatpush1.bf16.msra.mxu0 0
        %1148 = vmatprep.subr.bf16.mxu0 0
        %1149 = vmatpush1.bf16.msra.mxu0 0
        %1150 = vmatprep.subr.bf16.mxu0 0
        %1151 = vmatpush1.bf16.msra.mxu0 0
        %1152 = vmatprep.subr.bf16.mxu0 0
        %1153 = vmatpush1.bf16.msra.mxu0 0
        %1154 = vmatprep.subr.bf16.mxu0 0
        %1155 = vmatpush1.bf16.msra.mxu0 0
        %1156 = vmatprep.subr.bf16.mxu0 0
        %1157 = vmatpush1.bf16.msra.mxu0 0
        %1158 = vmatprep.subr.bf16.mxu0 0
        %1159 = vmatpush1.bf16.msra.mxu0 0
        %1160 = vmatprep.subr.bf16.mxu0 0
        %1161 = vmatpush1.bf16.msra.mxu0 0
        %1162 = vmatprep.subr.bf16.mxu0 0
        %1163 = vmatpush1.bf16.msra.mxu0 0
        %1164 = vmatprep.subr.bf16.mxu0 0
        %1165 = vmatpush1.bf16.msra.mxu0 0
        %1166 = vmatprep.subr.bf16.mxu0 0
        %1167 = vmatpush1.bf16.msra.mxu0 0
        %1168 = vmatprep.subr.bf16.mxu0 0
        %1169 = vmatpush1.bf16.msra.mxu0 0
        %1170 = vmatprep.subr.bf16.mxu0 0
        %1171 = vmatpush1.bf16.msra.mxu0 0
        %1172 = vmatprep.mubr.bf16.mxu0 0
        %1173 = vmatmul.mubr.bf16.gmra.mrb[0].mxu0 %v1135
        %v1174 = vpop.f32.mrb[0].mxu0
        %v1175 = vadd.f32 0.0, %v1174
        %v1176 = vpop.f32.mrb[0].mxu0
        %v1177 = vpop.f32.mrb[0].mxu0
        %v1178 = vpop.f32.mrb[0].mxu0
        %1179 = vdwg.mxu0
        %1181 = vrot.lane.b32.xlu0 %v1079, 8
        %v1182 = vpop.permute.xlu0 %1181
        %1185 = vrot.lane.b32.xlu0 %v1127, 16
        %v1186 = vpop.permute.xlu0 %1185
        %1189 = vrot.lane.b32.xlu0 %v1175, 24
        %v1190 = vpop.permute.xlu0 %1189
        %v1192 = vsel %vm732, %v1031, %v1182
        %vm1193 = vcmask 130048
        %v1194 = vsel %vm1193, %v1192, %v1186
        %vm1195 = vcmask 195584
        %v1196 = vsel %vm1195, %v1194, %v1190
        %v1197 = vpack.c.bf16 %v1196, %v1196
        %v1198 = vld [vmem:[#allocation11] sm:$0xf]
        %v1199 = vld [vmem:[#allocation11 + $0x4] sm:$0xf]
        %v1200 = vld [vmem:[#allocation11 + $0x8] sm:$0xf]
        %v1201 = vld [vmem:[#allocation11 + $0xc] sm:$0xf]
        %v1202 = vld [vmem:[#allocation13] sm:$0x1]
        %v1204 = vlaneseq
        %v1205 = vshrl.u32 %v1204, 7
        %v1206 = vsub.s32 0, %v1205
        %v1207 = vrot.slane %v1202, %v1206
        %v1213 = vunpack.c.l.b16 %v1198
        %v1214 = vunpack.c.l.b16 %v1199
        %v1215 = vunpack.c.l.b16 %v1200
        %v1216 = vunpack.c.l.b16 %v1201
        %v1217 = vpack.c.b16 %v1214, %v1213
        %v1218 = vpack.c.b16 %v1216, %v1215
        %v1222 = vsel %vm619, %v1197, 0
        %1224 = vmatprep.subr.bf16.mxu0 0
        %1225 = vmatpush1.bf16.msra.mxu0 %v1217
        %1226 = vmatprep.subr.bf16.mxu0 0
        %1227 = vmatpush1.bf16.msra.mxu0 %v1218
        %1228 = vmatprep.subr.bf16.mxu0 0
        %1229 = vmatpush1.bf16.msra.mxu0 0
        %1230 = vmatprep.subr.bf16.mxu0 0
        %1231 = vmatpush1.bf16.msra.mxu0 0
        %1232 = vmatprep.subr.bf16.mxu0 0
        %1233 = vmatpush1.bf16.msra.mxu0 0
        %1234 = vmatprep.subr.bf16.mxu0 0
        %1235 = vmatpush1.bf16.msra.mxu0 0
        %1236 = vmatprep.subr.bf16.mxu0 0
        %1237 = vmatpush1.bf16.msra.mxu0 0
        %1238 = vmatprep.subr.bf16.mxu0 0
        %1239 = vmatpush1.bf16.msra.mxu0 0
        %1240 = vmatprep.subr.bf16.mxu0 0
        %1241 = vmatpush1.bf16.msra.mxu0 0
        %1242 = vmatprep.subr.bf16.mxu0 0
        %1243 = vmatpush1.bf16.msra.mxu0 0
        %1244 = vmatprep.subr.bf16.mxu0 0
        %1245 = vmatpush1.bf16.msra.mxu0 0
        %1246 = vmatprep.subr.bf16.mxu0 0
        %1247 = vmatpush1.bf16.msra.mxu0 0
        %1248 = vmatprep.subr.bf16.mxu0 0
        %1249 = vmatpush1.bf16.msra.mxu0 0
        %1250 = vmatprep.subr.bf16.mxu0 0
        %1251 = vmatpush1.bf16.msra.mxu0 0
        %1252 = vmatprep.subr.bf16.mxu0 0
        %1253 = vmatpush1.bf16.msra.mxu0 0
        %1254 = vmatprep.subr.bf16.mxu0 0
        %1255 = vmatpush1.bf16.msra.mxu0 0
        %1256 = vmatprep.mubr.bf16.mxu0 0
        %1257 = vmatmul.mubr.bf16.gmra.mrb[0].mxu0 %v1222
        %v1258 = vpop.f32.mrb[0].mxu0
        %v1259 = vadd.f32 %v1207, %v1258
        %v1260 = vpop.f32.mrb[0].mxu0
        %v1261 = vpop.f32.mrb[0].mxu0
        %v1262 = vpop.f32.mrb[0].mxu0
        %1263 = vdwg.mxu0
        %v1264 = vadd.f32 %v616, %v1259
        %v1265 = vld [vmem:[#allocation14] sm:$0x1]
        %v1266 = vld [vmem:[#allocation16] sm:$0x1]
        %v1267 = vsel %vm619, %v1264, 0.0
        %1268 = vadd.xlane.f32.xlu0 %v1267
        %v1269 = vpop.xlane.xlu0 %1268
        %v1270 = vmul.f32 %v1269, %v623
        %v1271 = vsub.f32 %v1264, %v1270
        %v1272 = vmul.f32 %v1271, %v1271
        %v1273 = vsel %vm619, %v1272, 0.0
        %1274 = vadd.xlane.f32.xlu0 %v1273
        %v1275 = vpop.xlane.xlu0 %1274
        %v1276 = vmul.f32 %v1275, %v623
        %v1277 = vadd.f32 %v1276, 1e-05
        %v1278 = vrsqrt.pop %v1277
        %v1279 = vmul.f32 %v1271, %v1278
        %v1281 = vlaneseq
        %v1282 = vshrl.u32 %v1281, 7
        %v1283 = vsub.s32 0, %v1282
        %v1284 = vrot.slane %v1265, %v1283
        %v1286 = vmul.f32 %v1279, %v1284
        %v1288 = vlaneseq
        %v1289 = vshrl.u32 %v1288, 7
        %v1290 = vsub.s32 0, %v1289
        %v1291 = vrot.slane %v1266, %v1290
        %v1293 = vadd.f32 %v1286, %v1291
        %v1294 = vpack.c.bf16 %v1293, %v1293
        %v1295 = vld [vmem:[#allocation17] sm:$0xf]
        %v1296 = vld [vmem:[#allocation17 + $0x4] sm:$0xf]
        %v1297 = vld [vmem:[#allocation17 + $0x8] sm:$0xf]
        %v1298 = vld [vmem:[#allocation17 + $0xc] sm:$0xf]
        %v1299 = vld [vmem:[#allocation19] sm:$0x1]
        %v1301 = vlaneseq
        %v1302 = vshrl.u32 %v1301, 7
        %v1303 = vsub.s32 0, %v1302
        %v1304 = vrot.slane %v1299, %v1303
        %v1310 = vunpack.c.l.b16 %v1295
        %v1311 = vunpack.c.l.b16 %v1296
        %v1312 = vunpack.c.l.b16 %v1297
        %v1313 = vunpack.c.l.b16 %v1298
        %v1314 = vpack.c.b16 %v1311, %v1310
        %v1315 = vpack.c.b16 %v1313, %v1312
        %v1319 = vsel %vm619, %v1294, 0
        %1321 = vmatprep.subr.bf16.mxu0 0
        %1322 = vmatpush1.bf16.msra.mxu0 %v1314
        %1323 = vmatprep.subr.bf16.mxu0 0
        %1324 = vmatpush1.bf16.msra.mxu0 %v1315
        %1325 = vmatprep.subr.bf16.mxu0 0
        %1326 = vmatpush1.bf16.msra.mxu0 0
        %1327 = vmatprep.subr.bf16.mxu0 0
        %1328 = vmatpush1.bf16.msra.mxu0 0
        %1329 = vmatprep.subr.bf16.mxu0 0
        %1330 = vmatpush1.bf16.msra.mxu0 0
        %1331 = vmatprep.subr.bf16.mxu0 0
        %1332 = vmatpush1.bf16.msra.mxu0 0
        %1333 = vmatprep.subr.bf16.mxu0 0
        %1334 = vmatpush1.bf16.msra.mxu0 0
        %1335 = vmatprep.subr.bf16.mxu0 0
        %1336 = vmatpush1.bf16.msra.mxu0 0
        %1337 = vmatprep.subr.bf16.mxu0 0
        %1338 = vmatpush1.bf16.msra.mxu0 0
        %1339 = vmatprep.subr.bf16.mxu0 0
        %1340 = vmatpush1.bf16.msra.mxu0 0
        %1341 = vmatprep.subr.bf16.mxu0 0
        %1342 = vmatpush1.bf16.msra.mxu0 0
        %1343 = vmatprep.subr.bf16.mxu0 0
        %1344 = vmatpush1.bf16.msra.mxu0 0
        %1345 = vmatprep.subr.bf16.mxu0 0
        %1346 = vmatpush1.bf16.msra.mxu0 0
        %1347 = vmatprep.subr.bf16.mxu0 0
        %1348 = vmatpush1.bf16.msra.mxu0 0
        %1349 = vmatprep.subr.bf16.mxu0 0
        %1350 = vmatpush1.bf16.msra.mxu0 0
        %1351 = vmatprep.subr.bf16.mxu0 0
        %1352 = vmatpush1.bf16.msra.mxu0 0
        %1353 = vmatprep.mubr.bf16.mxu0 0
        %1354 = vmatmul.mubr.bf16.gmra.mrb[0].mxu0 %v1319
        %v1355 = vpop.f32.mrb[0].mxu0
        %v1356 = vadd.f32 %v1304, %v1355
        %v1357 = vpop.f32.mrb[0].mxu0
        %v1358 = vpop.f32.mrb[0].mxu0
        %v1359 = vpop.f32.mrb[0].mxu0
        %1360 = vdwg.mxu0
        %v1361 = vmul.f32 %v1356, 0.5
        %v1362 = vmul.f32 %v1356, 0.044715
        %v1363 = vmul.f32 %v1362, %v1356
        %v1364 = vmul.f32 %v1363, %v1356
        %v1365 = vadd.f32 %v1356, %v1364
        %v1366 = vmul.f32 %v1365, 0.7978846
        %v1367 = vtanh.pop %v1366
        %v1368 = vadd.f32 %v1367, 1.0
        %v1369 = vmul.f32 %v1361, %v1368
        %v1370 = vpack.c.bf16 %v1369, %v1369
        %v1371 = vld [vmem:[#allocation20] sm:$0xf]
        %v1372 = vld [vmem:[#allocation20 + $0x4] sm:$0xf]
        %v1373 = vld [vmem:[#allocation20 + $0x8] sm:$0xf]
        %v1374 = vld [vmem:[#allocation20 + $0xc] sm:$0xf]
        %v1375 = vld [vmem:[#allocation20 + $0x10] sm:$0xf]
        %v1376 = vld [vmem:[#allocation20 + $0x14] sm:$0xf]
        %v1377 = vld [vmem:[#allocation20 + $0x18] sm:$0xf]
        %v1378 = vld [vmem:[#allocation20 + $0x1c] sm:$0xf]
        %v1379 = vld [vmem:[#allocation20 + $0x20] sm:$0xf]
        %v1380 = vld [vmem:[#allocation20 + $0x24] sm:$0xf]
        %v1381 = vld [vmem:[#allocation20 + $0x28] sm:$0xf]
        %v1382 = vld [vmem:[#allocation20 + $0x2c] sm:$0xf]
        %v1383 = vld [vmem:[#allocation20 + $0x30] sm:$0xf]
        %v1384 = vld [vmem:[#allocation20 + $0x34] sm:$0xf]
        %v1385 = vld [vmem:[#allocation20 + $0x38] sm:$0xf]
        %v1386 = vld [vmem:[#allocation20 + $0x3c] sm:$0xf]
        %v1387 = vld [vmem:[#allocation22] sm:$0x1]
        %v1389 = vlaneseq
        %v1390 = vshrl.u32 %v1389, 7
        %v1391 = vsub.s32 0, %v1390
        %v1392 = vrot.slane %v1387, %v1391
        %v1410 = vunpack.c.l.b16 %v1371
        %v1411 = vunpack.c.l.b16 %v1372
        %v1412 = vunpack.c.l.b16 %v1373
        %v1413 = vunpack.c.l.b16 %v1374
        %v1414 = vunpack.c.l.b16 %v1375
        %v1415 = vunpack.c.l.b16 %v1376
        %v1416 = vunpack.c.l.b16 %v1377
        %v1417 = vunpack.c.l.b16 %v1378
        %v1418 = vunpack.c.l.b16 %v1379
        %v1419 = vunpack.c.l.b16 %v1380
        %v1420 = vunpack.c.l.b16 %v1381
        %v1421 = vunpack.c.l.b16 %v1382
        %v1422 = vunpack.c.l.b16 %v1383
        %v1423 = vunpack.c.l.b16 %v1384
        %v1424 = vunpack.c.l.b16 %v1385
        %v1425 = vunpack.c.l.b16 %v1386
        %v1426 = vpack.c.b16 %v1411, %v1410
        %v1427 = vpack.c.b16 %v1413, %v1412
        %v1428 = vpack.c.b16 %v1415, %v1414
        %v1429 = vpack.c.b16 %v1417, %v1416
        %v1430 = vpack.c.b16 %v1419, %v1418
        %v1431 = vpack.c.b16 %v1421, %v1420
        %v1432 = vpack.c.b16 %v1423, %v1422
        %v1433 = vpack.c.b16 %v1425, %v1424
        %1442 = vmatprep.subr.bf16.mxu0 0
        %1443 = vmatpush1.bf16.msra.mxu0 %v1426
        %1444 = vmatprep.subr.bf16.mxu0 0
        %1445 = vmatpush1.bf16.msra.mxu0 %v1427
        %1446 = vmatprep.subr.bf16.mxu0 0
        %1447 = vmatpush1.bf16.msra.mxu0 %v1428
        %1448 = vmatprep.subr.bf16.mxu0 0
        %1449 = vmatpush1.bf16.msra.mxu0 %v1429
        %1450 = vmatprep.subr.bf16.mxu0 0
        %1451 = vmatpush1.bf16.msra.mxu0 %v1430
        %1452 = vmatprep.subr.bf16.mxu0 0
        %1453 = vmatpush1.bf16.msra.mxu0 %v1431
        %1454 = vmatprep.subr.bf16.mxu0 0
        %1455 = vmatpush1.bf16.msra.mxu0 %v1432
        %1456 = vmatprep.subr.bf16.mxu0 0
        %1457 = vmatpush1.bf16.msra.mxu0 %v1433
        %1458 = vmatprep.subr.bf16.mxu0 0
        %1459 = vmatpush1.bf16.msra.mxu0 0
        %1460 = vmatprep.subr.bf16.mxu0 0
        %1461 = vmatpush1.bf16.msra.mxu0 0
        %1462 = vmatprep.subr.bf16.mxu0 0
        %1463 = vmatpush1.bf16.msra.mxu0 0
        %1464 = vmatprep.subr.bf16.mxu0 0
        %1465 = vmatpush1.bf16.msra.mxu0 0
        %1466 = vmatprep.subr.bf16.mxu0 0
        %1467 = vmatpush1.bf16.msra.mxu0 0
        %1468 = vmatprep.subr.bf16.mxu0 0
        %1469 = vmatpush1.bf16.msra.mxu0 0
        %1470 = vmatprep.subr.bf16.mxu0 0
        %1471 = vmatpush1.bf16.msra.mxu0 0
        %1472 = vmatprep.subr.bf16.mxu0 0
        %1473 = vmatpush1.bf16.msra.mxu0 0
        %1474 = vmatprep.mubr.bf16.mxu0 0
        %1475 = vmatmul.mubr.bf16.gmra.mrb[0].mxu0 %v1370
        %v1476 = vpop.f32.mrb[0].mxu0
        %v1477 = vadd.f32 %v1392, %v1476
        %v1478 = vpop.f32.mrb[0].mxu0
        %v1479 = vpop.f32.mrb[0].mxu0
        %v1480 = vpop.f32.mrb[0].mxu0
        %1481 = vdwg.mxu0
        %v1482 = vadd.f32 %v1264, %v1477
        %v1483 = vpack.c.bf16 %v1482, %v1482
        %vm1484 = vcmask 257024
        %1485 = vst.msk [vmem:[%s613] sm:$0xf] %vm1484, %v1483
        %s1486 = sand.u32 %s322, 1
        %s1487 = scalar_lea.sflag [#allocation4], %s1486
        %s1488 = sand.u32 %s322, 1
        %s1489 = smul.addr %s1488, 4
        %s1490 = scalar_lea.vmem [#allocation23], %s1489
        // Predicated region
        $region125: #{tpu_custom_call.1} parent=71 // pred_check
          %p1491 = pneg %p332
        $region126: #{tpu_custom_call.1} parent=71 // pred_check_branch
          %1493 = sbr.rel (%p1491) target = $region128
        $region127: #{tpu_custom_call.1} parent=71 // pred_region
          %s1495 = ssub.s32 64, 64
          %1496 = vsyncadd %s1487, %s1495
          %s1497 = smul.addr %s36, 64
          %s1498 = scalar_lea.hbm %s13, %s1497
          %s1500 = sshll.u32 %s1490, 4
          %s1501 = int_to_ptr.vmem [resolvable:$true] %s1500
          %1503 = dma.vmem_to_hbm [thread:$0]  %s1501, 64, %s1498, %s1487
        $region128: #{tpu_custom_call.1} parent=71 // pred_fallthru
          _
      $region72: #{tpu_custom_call.1} parent=5 // pred_fallthru
        _
      %p1504 = scmp.le.s32.totalorder 2, %s31
      // Predicated region
      $region129: #{tpu_custom_call.1} parent=5 // pred_check
        %p1505 = pneg %p1504
      $region130: #{tpu_custom_call.1} parent=5 // pred_check_branch
        %1507 = sbr.rel (%p1505) target = $region132
      $region131: #{tpu_custom_call.1} parent=5 // pred_region
        %s1508 = ssub.s32 %s31, 2
        // Predicated region
        $region133: #{tpu_custom_call.1} parent=131 // pred_check
          %p1509 = pneg %p338
        $region134: #{tpu_custom_call.1} parent=131 // pred_check_branch
          %1511 = sbr.rel (%p1509) target = $region136
        $region135: #{tpu_custom_call.1} parent=131 // pred_region
          %s1512 = sand.u32 %s323, 1
          %s1513 = scalar_lea.sflag [#allocation4], %s1512
          %s1514 = sand.u32 %s323, 1
          %s1515 = smul.addr %s1514, 4
          %s1516 = scalar_lea.vmem [#allocation23], %s1515
          %1517 = dma.done %s1513, 64
        $region136: #{tpu_custom_call.1} parent=131 // pred_fallthru
          _
      $region132: #{tpu_custom_call.1} parent=5 // pred_fallthru
        _
    $region6: #{tpu_custom_call.1} parent=1 // loop_footer
      %s35 = sadd.s32 1, %s31
    $region7: #{tpu_custom_call.1} parent=1 // loop_footer_branch
      %30 = sbr.rel target = $region3
    $region8: #{tpu_custom_call.1} parent=1 // loop_exit
      _
    %1518 = vsyncpa [#allocation3], 1
    %s1519 = scalar_lea.sflag [#allocation3], 1
    %1520 = vsyncpa %s1519, 1
    %1521 = vsyncpa [#allocation6], 1
    %1522 = vsyncpa [#allocation9], 1
    %1523 = vsyncpa [#allocation12], 1
    %1524 = vsyncpa [#allocation15], 1
    %1525 = vsyncpa [#allocation18], 1
    %1526 = vsyncpa [#allocation21], 1
    %1527 = vsyncpa [#allocation4], 1
    %s1528 = scalar_lea.sflag [#allocation4], 1
    %1529 = vsyncpa %s1528, 1

</llo_original>
